<compile_context>
chip_gen: v6e
topology: v6e:2x2x1
jax: 0.10.0
libtpu: 0.0.40
codegen_flags: <defaults>
</compile_context>

<pallas_src>
import functools

import numpy as np
import jax
import jax.numpy as jnp
from jax import lax
from jax.experimental import pallas as pl
from jax.experimental.pallas import tpu as pltpu

try:
    _VMEM = pltpu.MemorySpace.VMEM
except AttributeError:  # older pltpu naming
    _VMEM = pltpu.TPUMemorySpace.VMEM


# ---------------------------------------------------------------------------
# Trace-time constant builders (numpy -> baked into the program as constants).
# These are tiny: (4+9) x N*H*W f32 = ~26 KiB at the test sizes.
# ---------------------------------------------------------------------------
def _build_parity_masks(N, H, W):
    """0/1 masks (4, N*H*W): mask[t, p] = 1 iff pixel p has (h%2, w%2) ==
    (kh, kw) with t = kh*2 + kw.  Used to realize the stride-2 pixel shuffle
    of the transposed conv without any scatter matrix."""
    NHW = N * H * W
    p = np.arange(NHW)
    r = p % (H * W)
    h, w = r // W, r % W
    M = np.zeros((4, NHW), np.float32)
    for kh in range(2):
        for kw in range(2):
            M[kh * 2 + kw] = ((h % 2 == kh) & (w % 2 == kw)).astype(np.float32)
    return M


def _build_tap_masks(N, H, W):
    """Validity masks (9, N*H*W) for the 3x3 taps on the flattened pixel axis.
    Zero where (h+dh, w+dw) is outside the image -> implements the zero pad
    and also kills roll wrap-around across rows / samples."""
    NHW = N * H * W
    p = np.arange(NHW)
    r = p % (H * W)
    h, w = r // W, r % W
    M = np.zeros((9, NHW), np.float32)
    for dh in (-1, 0, 1):
        for dw in (-1, 0, 1):
            t = (dh + 1) * 3 + (dw + 1)
            ok = (h + dh >= 0) & (h + dh < H) & (w + dw >= 0) & (w + dw < W)
            M[t] = ok.astype(np.float32)
    return M


# ---------------------------------------------------------------------------
# The fused kernel. All activations live as (C, N*H*W) f32 values in VMEM.
# ---------------------------------------------------------------------------
def _decoder_block_kernel(xup_ref, skip_ref, pmask_ref, hmask_ref,
                          wup_ref, bup_ref,
                          w1_ref, b1_ref, g1_ref, be1_ref,
                          w2_ref, b2_ref, g2_ref, be2_ref,
                          o_ref,
                          a_scr, upstk_scr, stk1_scr, stk2_scr,
                          *, W):
    Co, NHW = o_ref.shape
    Cin = xup_ref.shape[0]
    Cs = skip_ref.shape[0]
    Ctot = a_scr.shape[0]

    # --- ConvTranspose2d(k=2, s=2): parity-masked NN-upsampled input, 1 dot --
    # up[co, p] = bup[co] + sum_{t,ci} wup[co, t*Cin+ci] * pmask[t,p] * xup[ci,p]
    xu = xup_ref[...]                                      # (Cin, N*H*W)
    for t in range(4):                                     # t = (h%2)*2 + (w%2)
        upstk_scr[t * Cin:(t + 1) * Cin, :] = xu * pmask_ref[t:t + 1, :]
    up = jnp.dot(wup_ref[...], upstk_scr[...],
                 preferred_element_type=jnp.float32) + bup_ref[...]  # (Co, NHW)

    # --- concat([skip, up(x)]) along channels, written straight to scratch ---
    a_scr[0:Cs, :] = skip_ref[...]
    a_scr[Cs:Ctot, :] = up

    # --- conv3x3(pad=1) -> BatchNorm(batch stats) -> ReLU, one matmul each ---
    def conv_bn_relu(a, stk_scr, C, w_ref, b_ref, g_ref, be_ref):
        # Build the 9-tap rolled+masked stacked operand: (9*C, NHW)
        for t in range(9):                                 # t = (dh+1)*3+(dw+1)
            dh, dw = t // 3 - 1, t % 3 - 1
            d = dh * W + dw                                # flat-pixel shift
            if d == 0:
                stk_scr[t * C:(t + 1) * C, :] = a
            else:
                stk_scr[t * C:(t + 1) * C, :] = (
                    pltpu.roll(a, shift=(-d) % NHW, axis=1)
                    * hmask_ref[t:t + 1, :])
        acc = jnp.dot(w_ref[...], stk_scr[...],
                      preferred_element_type=jnp.float32) + b_ref[...]
        # BatchNorm2d training-mode batch statistics (biased var, eps=1e-5)
        mean = jnp.mean(acc, axis=1, keepdims=True)
        cen = acc - mean
        var = jnp.mean(cen * cen, axis=1, keepdims=True)
        out = cen * lax.rsqrt(var + 1e-5) * g_ref[...] + be_ref[...]
        return jnp.maximum(out, 0.0)                       # ReLU

    h1 = conv_bn_relu(a_scr[...], stk1_scr, Ctot, w1_ref, b1_ref, g1_ref, be1_ref)
    o_ref[...] = conv_bn_relu(h1, stk2_scr, Co, w2_ref, b2_ref, g2_ref, be2_ref)


# ---------------------------------------------------------------------------
# decoder_block forward (NCHW in / NCHW out)
# ---------------------------------------------------------------------------
def decoder_block_forward(inputs_nchw, skip_nchw, p):
    x = inputs_nchw.astype(jnp.float32)                    # (N, Cin, Hi, Wi)
    skip = skip_nchw.astype(jnp.float32)                   # (N, Cs, Hs, Ws)
    N, Cin, Hi, Wi = x.shape
    Cs = skip.shape[1]
    Co = p["up_b"].shape[0]
    H, W = 2 * Hi, 2 * Wi
    Ctot = Cs + Co
    NHW = N * H * W

    # ---- tiny one-time layout prep (channels -> sublanes, pixels -> lanes) --
    # Nearest-neighbor 2x duplication of x: x_up[ci, (n,h,w)] = x[ci,n,h//2,w//2]
    x_cm = jnp.transpose(x, (1, 0, 2, 3))                  # (Cin, N, Hi, Wi)
    x_up = jnp.broadcast_to(x_cm[:, :, :, None, :, None],
                            (Cin, N, Hi, 2, Wi, 2)).reshape(Cin, NHW)
    hs, ws = skip.shape[2], skip.shape[3]
    top, left = (hs - H) // 2, (ws - W) // 2               # CenterCrop
    skip_cm = jnp.transpose(skip[:, :, top:top + H, left:left + W],
                            (1, 0, 2, 3)).reshape(Cs, NHW)

    # ConvT weight (Cin, Co, 2, 2) -> (Co, 4*Cin): column index = t*Cin + ci
    wup = jnp.transpose(p["up_w"], (1, 2, 3, 0)).reshape(Co, 4 * Cin)
    bup = p["up_b"].reshape(Co, 1)
    # Conv weights HWIO (3,3,C,Co) -> (Co, 9*C): column index = t*C + ci
    w1s = jnp.transpose(p["w1"].reshape(9, Ctot, Co), (2, 0, 1)).reshape(Co, 9 * Ctot)
    w2s = jnp.transpose(p["w2"].reshape(9, Co, Co), (2, 0, 1)).reshape(Co, 9 * Co)
    b1 = p["b1"].reshape(Co, 1); g1 = p["g1"].reshape(Co, 1)
    be1 = p["be1"].reshape(Co, 1)
    b2 = p["b2"].reshape(Co, 1); g2 = p["g2"].reshape(Co, 1)
    be2 = p["be2"].reshape(Co, 1)

    pmask = jnp.asarray(_build_parity_masks(N, H, W))      # (4, NHW) 0/1
    hmask = jnp.asarray(_build_tap_masks(N, H, W))         # (9, NHW) 0/1

    vmem_spec = pl.BlockSpec(memory_space=_VMEM)
    in_bytes = 4 * (x_up.size + skip_cm.size + pmask.size + hmask.size
                    + wup.size + bup.size + w1s.size + b1.size + g1.size
                    + be1.size + w2s.size + b2.size + g2.size + be2.size)
    cost = pl.CostEstimate(
        flops=2 * Co * NHW * (4 * Cin + 9 * Ctot + 9 * Co),
        transcendentals=2 * Co,                             # rsqrt per BN channel
        bytes_accessed=in_bytes + 4 * Co * NHW)

    out_cm = pl.pallas_call(
        functools.partial(_decoder_block_kernel, W=W),
        out_shape=jax.ShapeDtypeStruct((Co, NHW), jnp.float32),
        in_specs=[vmem_spec] * 14,
        out_specs=vmem_spec,
        scratch_shapes=[
            pltpu.VMEM((Ctot, NHW), jnp.float32),           # concat([skip, up])
            pltpu.VMEM((4 * Cin, NHW), jnp.float32),        # ConvT stacked-K operand
            pltpu.VMEM((9 * Ctot, NHW), jnp.float32),       # conv1 stacked-K operand
            pltpu.VMEM((9 * Co, NHW), jnp.float32),         # conv2 stacked-K operand
        ],
        compiler_params=pltpu.CompilerParams(vmem_limit_bytes=8 * 1024 * 1024),
        cost_estimate=cost,
    )(x_up, skip_cm, pmask, hmask,
      wup, bup, w1s, b1, g1, be1, w2s, b2, g2, be2)

    # (Co, N*H*W) -> NCHW
    return jnp.transpose(out_cm.reshape(Co, N, H, W), (1, 0, 2, 3))


# ---------------------------------------------------------------------------
# Pure-JAX reference (independent path: einsum + lax.conv) for verification
# ---------------------------------------------------------------------------
def decoder_block_reference(inputs_nchw, skip_nchw, p):
    x = jnp.transpose(inputs_nchw, (0, 2, 3, 1)).astype(jnp.float32)
    skip = jnp.transpose(skip_nchw, (0, 2, 3, 1)).astype(jnp.float32)
    N, Hi, Wi, Ci = x.shape
    Co = p["up_b"].shape[0]
    y = jnp.einsum("nijc,cokl->nikjlo", x, p["up_w"]).reshape(
        N, 2 * Hi, 2 * Wi, Co) + p["up_b"]
    H, W = 2 * Hi, 2 * Wi
    hs, ws = skip.shape[1], skip.shape[2]
    top, left = (hs - H) // 2, (ws - W) // 2
    xcat = jnp.concatenate([skip[:, top:top + H, left:left + W, :], y], axis=-1)

    def conv_ref(z, w, b):
        return lax.conv_general_dilated(
            z, w, (1, 1), "SAME",
            dimension_numbers=("NHWC", "HWIO", "NHWC")) + b

    def bn_relu_ref(z, g, be):
        mean = jnp.mean(z, axis=(0, 1, 2), keepdims=True)
        var = jnp.mean((z - mean) ** 2, axis=(0, 1, 2), keepdims=True)
        return jnp.maximum((z - mean) * lax.rsqrt(var + 1e-5) * g + be, 0.0)

    h = bn_relu_ref(conv_ref(xcat, p["w1"], p["b1"]), p["g1"], p["be1"])
    h = bn_relu_ref(conv_ref(h, p["w2"], p["b2"]), p["g2"], p["be2"])
    return jnp.transpose(h, (0, 3, 1, 2))


# ---------------------------------------------------------------------------
if __name__ == "__main__":
    # decoder_block(in_channels=8, out_channels=4)
    N, Cin, Cout = 2, 8, 4
    Hi = Wi = 8                       # low-res decoder input -> upsampled to 16x16
    Hs = Ws = 20                      # skip is larger; CenterCrop to 16x16
    skip_C = Cin - Cout               # so that concat has Cin channels

    key = jax.random.PRNGKey(0)
    ks = jax.random.split(key, 8)

    params = {
        # ConvTranspose2d weight (Cin, Cout, 2, 2), bias (Cout,)
        "up_w": jax.random.normal(ks[0], (Cin, Cout, 2, 2), jnp.float32) * 0.1,
        "up_b": jax.random.normal(ks[1], (Cout,), jnp.float32) * 0.1,
        # conv1: Cin -> Cout, HWIO layout
        "w1": jax.random.normal(ks[2], (3, 3, Cin, Cout), jnp.float32) * 0.1,
        "b1": jax.random.normal(ks[3], (Cout,), jnp.float32) * 0.1,
        "g1": jnp.ones((Cout,), jnp.float32),
        "be1": jnp.zeros((Cout,), jnp.float32),
        # conv2: Cout -> Cout
        "w2": jax.random.normal(ks[4], (3, 3, Cout, Cout), jnp.float32) * 0.1,
        "b2": jax.random.normal(ks[5], (Cout,), jnp.float32) * 0.1,
        "g2": jnp.ones((Cout,), jnp.float32),
        "be2": jnp.zeros((Cout,), jnp.float32),
    }

    inputs = jax.random.normal(ks[6], (N, Cin, Hi, Wi), jnp.float32)   # NCHW
    skip = jax.random.normal(ks[7], (N, skip_C, Hs, Ws), jnp.float32)  # NCHW

    out = jax.jit(decoder_block_forward)(inputs, skip, params)
    out = jax.block_until_ready(out)
    ref = decoder_block_reference(inputs, skip, params)

    assert out.shape == (N, Cout, 2 * Hi, 2 * Wi), out.shape
    assert jnp.all(jnp.isfinite(out))
    assert jnp.allclose(out, ref, rtol=1e-4, atol=1e-4), float(
        jnp.max(jnp.abs(out - ref)))
    print("KERNEL_OK")
</pallas_src>

<mosaic_0001>
module attributes {stable_mosaic.version = 11 : i64} {
  func.func @_decoder_block_kernel(%arg0: memref<8x512xf32, #tpu.memory_space<vmem>>, %arg1: memref<4x512xf32, #tpu.memory_space<vmem>>, %arg2: memref<4x512xf32, #tpu.memory_space<vmem>>, %arg3: memref<9x512xf32, #tpu.memory_space<vmem>>, %arg4: memref<4x32xf32, #tpu.memory_space<vmem>>, %arg5: memref<4x1xf32, #tpu.memory_space<vmem>>, %arg6: memref<4x72xf32, #tpu.memory_space<vmem>>, %arg7: memref<4x1xf32, #tpu.memory_space<vmem>>, %arg8: memref<4x1xf32, #tpu.memory_space<vmem>>, %arg9: memref<4x1xf32, #tpu.memory_space<vmem>>, %arg10: memref<4x36xf32, #tpu.memory_space<vmem>>, %arg11: memref<4x1xf32, #tpu.memory_space<vmem>>, %arg12: memref<4x1xf32, #tpu.memory_space<vmem>>, %arg13: memref<4x1xf32, #tpu.memory_space<vmem>>, %arg14: memref<4x512xf32, #tpu.memory_space<vmem>>, %arg15: memref<8x512xf32, #tpu.memory_space<vmem>>, %arg16: memref<32x512xf32, #tpu.memory_space<vmem>>, %arg17: memref<72x512xf32, #tpu.memory_space<vmem>>, %arg18: memref<36x512xf32, #tpu.memory_space<vmem>>) attributes {dimension_semantics = [], scalar_prefetch = 0 : i64, scratch_operands = 4 : i64, tpu.core_type = #tpu.core_type<tc>} {
    %c0 = arith.constant 0 : index
    %c0_0 = arith.constant 0 : index
    %0 = vector.load %arg0[%c0, %c0_0] : memref<8x512xf32, #tpu.memory_space<vmem>>, vector<8x512xf32>
    %c0_1 = arith.constant 0 : index
    %c0_2 = arith.constant 0 : index
    %1 = vector.load %arg2[%c0_1, %c0_2] : memref<4x512xf32, #tpu.memory_space<vmem>>, vector<1x512xf32>
    %2 = vector.broadcast %1 : vector<1x512xf32> to vector<8x512xf32>
    %3 = arith.mulf %0, %2 : vector<8x512xf32>
    %c0_3 = arith.constant 0 : index
    %c0_4 = arith.constant 0 : index
    %4 = vector.load %arg16[%c0_3, %c0_4] : memref<32x512xf32, #tpu.memory_space<vmem>>, vector<8x512xf32>
    tpu.vector_store %arg16[%c0_3, %c0_4], %3 {strides = array<i32>} : memref<32x512xf32, #tpu.memory_space<vmem>>, vector<8x512xf32>,
    %c1 = arith.constant 1 : index
    %c0_5 = arith.constant 0 : index
    %5 = vector.load %arg2[%c1, %c0_5] : memref<4x512xf32, #tpu.memory_space<vmem>>, vector<1x512xf32>
    %6 = vector.broadcast %5 : vector<1x512xf32> to vector<8x512xf32>
    %7 = arith.mulf %0, %6 : vector<8x512xf32>
    %c8 = arith.constant 8 : index
    %c0_6 = arith.constant 0 : index
    %8 = vector.load %arg16[%c8, %c0_6] : memref<32x512xf32, #tpu.memory_space<vmem>>, vector<8x512xf32>
    tpu.vector_store %arg16[%c8, %c0_6], %7 {strides = array<i32>} : memref<32x512xf32, #tpu.memory_space<vmem>>, vector<8x512xf32>,
    %c2 = arith.constant 2 : index
    %c0_7 = arith.constant 0 : index
    %9 = vector.load %arg2[%c2, %c0_7] : memref<4x512xf32, #tpu.memory_space<vmem>>, vector<1x512xf32>
    %10 = vector.broadcast %9 : vector<1x512xf32> to vector<8x512xf32>
    %11 = arith.mulf %0, %10 : vector<8x512xf32>
    %c16 = arith.constant 16 : index
    %c0_8 = arith.constant 0 : index
    %12 = vector.load %arg16[%c16, %c0_8] : memref<32x512xf32, #tpu.memory_space<vmem>>, vector<8x512xf32>
    tpu.vector_store %arg16[%c16, %c0_8], %11 {strides = array<i32>} : memref<32x512xf32, #tpu.memory_space<vmem>>, vector<8x512xf32>,
    %c3 = arith.constant 3 : index
    %c0_9 = arith.constant 0 : index
    %13 = vector.load %arg2[%c3, %c0_9] : memref<4x512xf32, #tpu.memory_space<vmem>>, vector<1x512xf32>
    %14 = vector.broadcast %13 : vector<1x512xf32> to vector<8x512xf32>
    %15 = arith.mulf %0, %14 : vector<8x512xf32>
    %c24 = arith.constant 24 : index
    %c0_10 = arith.constant 0 : index
    %16 = vector.load %arg16[%c24, %c0_10] : memref<32x512xf32, #tpu.memory_space<vmem>>, vector<8x512xf32>
    tpu.vector_store %arg16[%c24, %c0_10], %15 {strides = array<i32>} : memref<32x512xf32, #tpu.memory_space<vmem>>, vector<8x512xf32>,
    %c0_11 = arith.constant 0 : index
    %c0_12 = arith.constant 0 : index
    %17 = vector.load %arg4[%c0_11, %c0_12] : memref<4x32xf32, #tpu.memory_space<vmem>>, vector<4x32xf32>
    %c0_13 = arith.constant 0 : index
    %c0_14 = arith.constant 0 : index
    %18 = vector.load %arg16[%c0_13, %c0_14] : memref<32x512xf32, #tpu.memory_space<vmem>>, vector<32x512xf32>
    %cst = arith.constant dense<0.000000e+00> : vector<4x512xf32>
    %19 = tpu.matmul %17, %18, %cst {dimension_numbers = #tpu.dot_dimension_numbers<[1], [0], [0], [1], [0, 0, 1, 1], [], []>} : vector<4x32xf32>, vector<32x512xf32>, vector<4x512xf32> -> vector<4x512xf32>
    %c0_15 = arith.constant 0 : index
    %c0_16 = arith.constant 0 : index
    %20 = vector.load %arg5[%c0_15, %c0_16] : memref<4x1xf32, #tpu.memory_space<vmem>>, vector<4x1xf32>
    %21 = vector.broadcast %20 : vector<4x1xf32> to vector<4x512xf32>
    %22 = arith.addf %19, %21 : vector<4x512xf32>
    %c0_17 = arith.constant 0 : index
    %c0_18 = arith.constant 0 : index
    %23 = vector.load %arg1[%c0_17, %c0_18] : memref<4x512xf32, #tpu.memory_space<vmem>>, vector<4x512xf32>
    %c0_19 = arith.constant 0 : index
    %c0_20 = arith.constant 0 : index
    %24 = vector.load %arg15[%c0_19, %c0_20] : memref<8x512xf32, #tpu.memory_space<vmem>>, vector<4x512xf32>
    tpu.vector_store %arg15[%c0_19, %c0_20], %23 {strides = array<i32>} : memref<8x512xf32, #tpu.memory_space<vmem>>, vector<4x512xf32>,
    %c4 = arith.constant 4 : index
    %c0_21 = arith.constant 0 : index
    %25 = vector.load %arg15[%c4, %c0_21] : memref<8x512xf32, #tpu.memory_space<vmem>>, vector<4x512xf32>
    tpu.vector_store %arg15[%c4, %c0_21], %22 {strides = array<i32>} : memref<8x512xf32, #tpu.memory_space<vmem>>, vector<4x512xf32>,
    %c0_22 = arith.constant 0 : index
    %c0_23 = arith.constant 0 : index
    %26 = vector.load %arg15[%c0_22, %c0_23] : memref<8x512xf32, #tpu.memory_space<vmem>>, vector<8x512xf32>
    %c17_i32 = arith.constant 17 : i32
    %27 = tpu.dynamic_rotate %26 by %c17_i32 dim 1 : vector<8x512xf32>, i32 -> vector<8x512xf32>
    %c0_24 = arith.constant 0 : index
    %c0_25 = arith.constant 0 : index
    %28 = vector.load %arg3[%c0_24, %c0_25] : memref<9x512xf32, #tpu.memory_space<vmem>>, vector<1x512xf32>
    %29 = vector.broadcast %28 : vector<1x512xf32> to vector<8x512xf32>
    %30 = arith.mulf %27, %29 : vector<8x512xf32>
    %c0_26 = arith.constant 0 : index
    %c0_27 = arith.constant 0 : index
    %31 = vector.load %arg17[%c0_26, %c0_27] : memref<72x512xf32, #tpu.memory_space<vmem>>, vector<8x512xf32>
    tpu.vector_store %arg17[%c0_26, %c0_27], %30 {strides = array<i32>} : memref<72x512xf32, #tpu.memory_space<vmem>>, vector<8x512xf32>,
    %c16_i32 = arith.constant 16 : i32
    %32 = tpu.dynamic_rotate %26 by %c16_i32 dim 1 : vector<8x512xf32>, i32 -> vector<8x512xf32>
    %c1_28 = arith.constant 1 : index
    %c0_29 = arith.constant 0 : index
    %33 = vector.load %arg3[%c1_28, %c0_29] : memref<9x512xf32, #tpu.memory_space<vmem>>, vector<1x512xf32>
    %34 = vector.broadcast %33 : vector<1x512xf32> to vector<8x512xf32>
    %35 = arith.mulf %32, %34 : vector<8x512xf32>
    %c8_30 = arith.constant 8 : index
    %c0_31 = arith.constant 0 : index
    %36 = vector.load %arg17[%c8_30, %c0_31] : memref<72x512xf32, #tpu.memory_space<vmem>>, vector<8x512xf32>
    tpu.vector_store %arg17[%c8_30, %c0_31], %35 {strides = array<i32>} : memref<72x512xf32, #tpu.memory_space<vmem>>, vector<8x512xf32>,
    %c15_i32 = arith.constant 15 : i32
    %37 = tpu.dynamic_rotate %26 by %c15_i32 dim 1 : vector<8x512xf32>, i32 -> vector<8x512xf32>
    %c2_32 = arith.constant 2 : index
    %c0_33 = arith.constant 0 : index
    %38 = vector.load %arg3[%c2_32, %c0_33] : memref<9x512xf32, #tpu.memory_space<vmem>>, vector<1x512xf32>
    %39 = vector.broadcast %38 : vector<1x512xf32> to vector<8x512xf32>
    %40 = arith.mulf %37, %39 : vector<8x512xf32>
    %c16_34 = arith.constant 16 : index
    %c0_35 = arith.constant 0 : index
    %41 = vector.load %arg17[%c16_34, %c0_35] : memref<72x512xf32, #tpu.memory_space<vmem>>, vector<8x512xf32>
    tpu.vector_store %arg17[%c16_34, %c0_35], %40 {strides = array<i32>} : memref<72x512xf32, #tpu.memory_space<vmem>>, vector<8x512xf32>,
    %c1_i32 = arith.constant 1 : i32
    %42 = tpu.dynamic_rotate %26 by %c1_i32 dim 1 : vector<8x512xf32>, i32 -> vector<8x512xf32>
    %c3_36 = arith.constant 3 : index
    %c0_37 = arith.constant 0 : index
    %43 = vector.load %arg3[%c3_36, %c0_37] : memref<9x512xf32, #tpu.memory_space<vmem>>, vector<1x512xf32>
    %44 = vector.broadcast %43 : vector<1x512xf32> to vector<8x512xf32>
    %45 = arith.mulf %42, %44 : vector<8x512xf32>
    %c24_38 = arith.constant 24 : index
    %c0_39 = arith.constant 0 : index
    %46 = vector.load %arg17[%c24_38, %c0_39] : memref<72x512xf32, #tpu.memory_space<vmem>>, vector<8x512xf32>
    tpu.vector_store %arg17[%c24_38, %c0_39], %45 {strides = array<i32>} : memref<72x512xf32, #tpu.memory_space<vmem>>, vector<8x512xf32>,
    %c32 = arith.constant 32 : index
    %c0_40 = arith.constant 0 : index
    %47 = vector.load %arg17[%c32, %c0_40] : memref<72x512xf32, #tpu.memory_space<vmem>>, vector<8x512xf32>
    tpu.vector_store %arg17[%c32, %c0_40], %26 {strides = array<i32>} : memref<72x512xf32, #tpu.memory_space<vmem>>, vector<8x512xf32>,
    %c511_i32 = arith.constant 511 : i32
    %48 = tpu.dynamic_rotate %26 by %c511_i32 dim 1 : vector<8x512xf32>, i32 -> vector<8x512xf32>
    %c5 = arith.constant 5 : index
    %c0_41 = arith.constant 0 : index
    %49 = vector.load %arg3[%c5, %c0_41] : memref<9x512xf32, #tpu.memory_space<vmem>>, vector<1x512xf32>
    %50 = vector.broadcast %49 : vector<1x512xf32> to vector<8x512xf32>
    %51 = arith.mulf %48, %50 : vector<8x512xf32>
    %c40 = arith.constant 40 : index
    %c0_42 = arith.constant 0 : index
    %52 = vector.load %arg17[%c40, %c0_42] : memref<72x512xf32, #tpu.memory_space<vmem>>, vector<8x512xf32>
    tpu.vector_store %arg17[%c40, %c0_42], %51 {strides = array<i32>} : memref<72x512xf32, #tpu.memory_space<vmem>>, vector<8x512xf32>,
    %c497_i32 = arith.constant 497 : i32
    %53 = tpu.dynamic_rotate %26 by %c497_i32 dim 1 : vector<8x512xf32>, i32 -> vector<8x512xf32>
    %c6 = arith.constant 6 : index
    %c0_43 = arith.constant 0 : index
    %54 = vector.load %arg3[%c6, %c0_43] : memref<9x512xf32, #tpu.memory_space<vmem>>, vector<1x512xf32>
    %55 = vector.broadcast %54 : vector<1x512xf32> to vector<8x512xf32>
    %56 = arith.mulf %53, %55 : vector<8x512xf32>
    %c48 = arith.constant 48 : index
    %c0_44 = arith.constant 0 : index
    %57 = vector.load %arg17[%c48, %c0_44] : memref<72x512xf32, #tpu.memory_space<vmem>>, vector<8x512xf32>
    tpu.vector_store %arg17[%c48, %c0_44], %56 {strides = array<i32>} : memref<72x512xf32, #tpu.memory_space<vmem>>, vector<8x512xf32>,
    %c496_i32 = arith.constant 496 : i32
    %58 = tpu.dynamic_rotate %26 by %c496_i32 dim 1 : vector<8x512xf32>, i32 -> vector<8x512xf32>
    %c7 = arith.constant 7 : index
    %c0_45 = arith.constant 0 : index
    %59 = vector.load %arg3[%c7, %c0_45] : memref<9x512xf32, #tpu.memory_space<vmem>>, vector<1x512xf32>
    %60 = vector.broadcast %59 : vector<1x512xf32> to vector<8x512xf32>
    %61 = arith.mulf %58, %60 : vector<8x512xf32>
    %c56 = arith.constant 56 : index
    %c0_46 = arith.constant 0 : index
    %62 = vector.load %arg17[%c56, %c0_46] : memref<72x512xf32, #tpu.memory_space<vmem>>, vector<8x512xf32>
    tpu.vector_store %arg17[%c56, %c0_46], %61 {strides = array<i32>} : memref<72x512xf32, #tpu.memory_space<vmem>>, vector<8x512xf32>,
    %c495_i32 = arith.constant 495 : i32
    %63 = tpu.dynamic_rotate %26 by %c495_i32 dim 1 : vector<8x512xf32>, i32 -> vector<8x512xf32>
    %c8_47 = arith.constant 8 : index
    %c0_48 = arith.constant 0 : index
    %64 = vector.load %arg3[%c8_47, %c0_48] : memref<9x512xf32, #tpu.memory_space<vmem>>, vector<1x512xf32>
    %65 = vector.broadcast %64 : vector<1x512xf32> to vector<8x512xf32>
    %66 = arith.mulf %63, %65 : vector<8x512xf32>
    %c64 = arith.constant 64 : index
    %c0_49 = arith.constant 0 : index
    %67 = vector.load %arg17[%c64, %c0_49] : memref<72x512xf32, #tpu.memory_space<vmem>>, vector<8x512xf32>
    tpu.vector_store %arg17[%c64, %c0_49], %66 {strides = array<i32>} : memref<72x512xf32, #tpu.memory_space<vmem>>, vector<8x512xf32>,
    %c0_50 = arith.constant 0 : index
    %c0_51 = arith.constant 0 : index
    %68 = vector.load %arg6[%c0_50, %c0_51] : memref<4x72xf32, #tpu.memory_space<vmem>>, vector<4x72xf32>
    %c0_52 = arith.constant 0 : index
    %c0_53 = arith.constant 0 : index
    %69 = vector.load %arg17[%c0_52, %c0_53] : memref<72x512xf32, #tpu.memory_space<vmem>>, vector<72x512xf32>
    %cst_54 = arith.constant dense<0.000000e+00> : vector<4x512xf32>
    %70 = tpu.matmul %68, %69, %cst_54 {dimension_numbers = #tpu.dot_dimension_numbers<[1], [0], [0], [1], [0, 0, 1, 1], [], []>} : vector<4x72xf32>, vector<72x512xf32>, vector<4x512xf32> -> vector<4x512xf32>
    %c0_55 = arith.constant 0 : index
    %c0_56 = arith.constant 0 : index
    %71 = vector.load %arg7[%c0_55, %c0_56] : memref<4x1xf32, #tpu.memory_space<vmem>>, vector<4x1xf32>
    %72 = vector.broadcast %71 : vector<4x1xf32> to vector<4x512xf32>
    %73 = arith.addf %70, %72 : vector<4x512xf32>
    %cst_57 = arith.constant dense<0.000000e+00> : vector<4xf32>
    %74 = vector.multi_reduction <add>, %73, %cst_57 [1] : vector<4x512xf32> to vector<4xf32>
    %75 = vector.shape_cast %74 : vector<4xf32> to vector<4x1xf32>
    %cst_58 = arith.constant 5.120000e+02 : f32
    %76 = vector.broadcast %cst_58 : f32 to vector<4x1xf32>
    %77 = arith.divf %75, %76 : vector<4x1xf32>
    %78 = vector.broadcast %77 : vector<4x1xf32> to vector<4x512xf32>
    %79 = arith.subf %73, %78 : vector<4x512xf32>
    %80 = arith.mulf %79, %79 : vector<4x512xf32>
    %cst_59 = arith.constant dense<0.000000e+00> : vector<4xf32>
    %81 = vector.multi_reduction <add>, %80, %cst_59 [1] : vector<4x512xf32> to vector<4xf32>
    %82 = vector.shape_cast %81 : vector<4xf32> to vector<4x1xf32>
    %cst_60 = arith.constant 5.120000e+02 : f32
    %83 = vector.broadcast %cst_60 : f32 to vector<4x1xf32>
    %84 = arith.divf %82, %83 : vector<4x1xf32>
    %cst_61 = arith.constant 9.99999974E-6 : f32
    %85 = vector.broadcast %cst_61 : f32 to vector<4x1xf32>
    %86 = arith.addf %84, %85 : vector<4x1xf32>
    %87 = math.rsqrt %86 : vector<4x1xf32>
    %88 = vector.broadcast %87 : vector<4x1xf32> to vector<4x512xf32>
    %89 = arith.mulf %79, %88 : vector<4x512xf32>
    %c0_62 = arith.constant 0 : index
    %c0_63 = arith.constant 0 : index
    %90 = vector.load %arg8[%c0_62, %c0_63] : memref<4x1xf32, #tpu.memory_space<vmem>>, vector<4x1xf32>
    %91 = vector.broadcast %90 : vector<4x1xf32> to vector<4x512xf32>
    %92 = arith.mulf %89, %91 : vector<4x512xf32>
    %c0_64 = arith.constant 0 : index
    %c0_65 = arith.constant 0 : index
    %93 = vector.load %arg9[%c0_64, %c0_65] : memref<4x1xf32, #tpu.memory_space<vmem>>, vector<4x1xf32>
    %94 = vector.broadcast %93 : vector<4x1xf32> to vector<4x512xf32>
    %95 = arith.addf %92, %94 : vector<4x512xf32>
    %cst_66 = arith.constant 0.000000e+00 : f32
    %96 = vector.broadcast %cst_66 : f32 to vector<4x512xf32>
    %97 = arith.maximumf %95, %96 : vector<4x512xf32>
    %c17_i32_67 = arith.constant 17 : i32
    %98 = tpu.dynamic_rotate %97 by %c17_i32_67 dim 1 : vector<4x512xf32>, i32 -> vector<4x512xf32>
    %c0_68 = arith.constant 0 : index
    %c0_69 = arith.constant 0 : index
    %99 = vector.load %arg3[%c0_68, %c0_69] : memref<9x512xf32, #tpu.memory_space<vmem>>, vector<1x512xf32>
    %100 = vector.broadcast %99 : vector<1x512xf32> to vector<4x512xf32>
    %101 = arith.mulf %98, %100 : vector<4x512xf32>
    %c0_70 = arith.constant 0 : index
    %c0_71 = arith.constant 0 : index
    %102 = vector.load %arg18[%c0_70, %c0_71] : memref<36x512xf32, #tpu.memory_space<vmem>>, vector<4x512xf32>
    tpu.vector_store %arg18[%c0_70, %c0_71], %101 {strides = array<i32>} : memref<36x512xf32, #tpu.memory_space<vmem>>, vector<4x512xf32>,
    %c16_i32_72 = arith.constant 16 : i32
    %103 = tpu.dynamic_rotate %97 by %c16_i32_72 dim 1 : vector<4x512xf32>, i32 -> vector<4x512xf32>
    %c1_73 = arith.constant 1 : index
    %c0_74 = arith.constant 0 : index
    %104 = vector.load %arg3[%c1_73, %c0_74] : memref<9x512xf32, #tpu.memory_space<vmem>>, vector<1x512xf32>
    %105 = vector.broadcast %104 : vector<1x512xf32> to vector<4x512xf32>
    %106 = arith.mulf %103, %105 : vector<4x512xf32>
    %c4_75 = arith.constant 4 : index
    %c0_76 = arith.constant 0 : index
    %107 = vector.load %arg18[%c4_75, %c0_76] : memref<36x512xf32, #tpu.memory_space<vmem>>, vector<4x512xf32>
    tpu.vector_store %arg18[%c4_75, %c0_76], %106 {strides = array<i32>} : memref<36x512xf32, #tpu.memory_space<vmem>>, vector<4x512xf32>,
    %c15_i32_77 = arith.constant 15 : i32
    %108 = tpu.dynamic_rotate %97 by %c15_i32_77 dim 1 : vector<4x512xf32>, i32 -> vector<4x512xf32>
    %c2_78 = arith.constant 2 : index
    %c0_79 = arith.constant 0 : index
    %109 = vector.load %arg3[%c2_78, %c0_79] : memref<9x512xf32, #tpu.memory_space<vmem>>, vector<1x512xf32>
    %110 = vector.broadcast %109 : vector<1x512xf32> to vector<4x512xf32>
    %111 = arith.mulf %108, %110 : vector<4x512xf32>
    %c8_80 = arith.constant 8 : index
    %c0_81 = arith.constant 0 : index
    %112 = vector.load %arg18[%c8_80, %c0_81] : memref<36x512xf32, #tpu.memory_space<vmem>>, vector<4x512xf32>
    tpu.vector_store %arg18[%c8_80, %c0_81], %111 {strides = array<i32>} : memref<36x512xf32, #tpu.memory_space<vmem>>, vector<4x512xf32>,
    %c1_i32_82 = arith.constant 1 : i32
    %113 = tpu.dynamic_rotate %97 by %c1_i32_82 dim 1 : vector<4x512xf32>, i32 -> vector<4x512xf32>
    %c3_83 = arith.constant 3 : index
    %c0_84 = arith.constant 0 : index
    %114 = vector.load %arg3[%c3_83, %c0_84] : memref<9x512xf32, #tpu.memory_space<vmem>>, vector<1x512xf32>
    %115 = vector.broadcast %114 : vector<1x512xf32> to vector<4x512xf32>
    %116 = arith.mulf %113, %115 : vector<4x512xf32>
    %c12 = arith.constant 12 : index
    %c0_85 = arith.constant 0 : index
    %117 = vector.load %arg18[%c12, %c0_85] : memref<36x512xf32, #tpu.memory_space<vmem>>, vector<4x512xf32>
    tpu.vector_store %arg18[%c12, %c0_85], %116 {strides = array<i32>} : memref<36x512xf32, #tpu.memory_space<vmem>>, vector<4x512xf32>,
    %c16_86 = arith.constant 16 : index
    %c0_87 = arith.constant 0 : index
    %118 = vector.load %arg18[%c16_86, %c0_87] : memref<36x512xf32, #tpu.memory_space<vmem>>, vector<4x512xf32>
    tpu.vector_store %arg18[%c16_86, %c0_87], %97 {strides = array<i32>} : memref<36x512xf32, #tpu.memory_space<vmem>>, vector<4x512xf32>,
    %c511_i32_88 = arith.constant 511 : i32
    %119 = tpu.dynamic_rotate %97 by %c511_i32_88 dim 1 : vector<4x512xf32>, i32 -> vector<4x512xf32>
    %c5_89 = arith.constant 5 : index
    %c0_90 = arith.constant 0 : index
    %120 = vector.load %arg3[%c5_89, %c0_90] : memref<9x512xf32, #tpu.memory_space<vmem>>, vector<1x512xf32>
    %121 = vector.broadcast %120 : vector<1x512xf32> to vector<4x512xf32>
    %122 = arith.mulf %119, %121 : vector<4x512xf32>
    %c20 = arith.constant 20 : index
    %c0_91 = arith.constant 0 : index
    %123 = vector.load %arg18[%c20, %c0_91] : memref<36x512xf32, #tpu.memory_space<vmem>>, vector<4x512xf32>
    tpu.vector_store %arg18[%c20, %c0_91], %122 {strides = array<i32>} : memref<36x512xf32, #tpu.memory_space<vmem>>, vector<4x512xf32>,
    %c497_i32_92 = arith.constant 497 : i32
    %124 = tpu.dynamic_rotate %97 by %c497_i32_92 dim 1 : vector<4x512xf32>, i32 -> vector<4x512xf32>
    %c6_93 = arith.constant 6 : index
    %c0_94 = arith.constant 0 : index
    %125 = vector.load %arg3[%c6_93, %c0_94] : memref<9x512xf32, #tpu.memory_space<vmem>>, vector<1x512xf32>
    %126 = vector.broadcast %125 : vector<1x512xf32> to vector<4x512xf32>
    %127 = arith.mulf %124, %126 : vector<4x512xf32>
    %c24_95 = arith.constant 24 : index
    %c0_96 = arith.constant 0 : index
    %128 = vector.load %arg18[%c24_95, %c0_96] : memref<36x512xf32, #tpu.memory_space<vmem>>, vector<4x512xf32>
    tpu.vector_store %arg18[%c24_95, %c0_96], %127 {strides = array<i32>} : memref<36x512xf32, #tpu.memory_space<vmem>>, vector<4x512xf32>,
    %c496_i32_97 = arith.constant 496 : i32
    %129 = tpu.dynamic_rotate %97 by %c496_i32_97 dim 1 : vector<4x512xf32>, i32 -> vector<4x512xf32>
    %c7_98 = arith.constant 7 : index
    %c0_99 = arith.constant 0 : index
    %130 = vector.load %arg3[%c7_98, %c0_99] : memref<9x512xf32, #tpu.memory_space<vmem>>, vector<1x512xf32>
    %131 = vector.broadcast %130 : vector<1x512xf32> to vector<4x512xf32>
    %132 = arith.mulf %129, %131 : vector<4x512xf32>
    %c28 = arith.constant 28 : index
    %c0_100 = arith.constant 0 : index
    %133 = vector.load %arg18[%c28, %c0_100] : memref<36x512xf32, #tpu.memory_space<vmem>>, vector<4x512xf32>
    tpu.vector_store %arg18[%c28, %c0_100], %132 {strides = array<i32>} : memref<36x512xf32, #tpu.memory_space<vmem>>, vector<4x512xf32>,
    %c495_i32_101 = arith.constant 495 : i32
    %134 = tpu.dynamic_rotate %97 by %c495_i32_101 dim 1 : vector<4x512xf32>, i32 -> vector<4x512xf32>
    %c8_102 = arith.constant 8 : index
    %c0_103 = arith.constant 0 : index
    %135 = vector.load %arg3[%c8_102, %c0_103] : memref<9x512xf32, #tpu.memory_space<vmem>>, vector<1x512xf32>
    %136 = vector.broadcast %135 : vector<1x512xf32> to vector<4x512xf32>
    %137 = arith.mulf %134, %136 : vector<4x512xf32>
    %c32_104 = arith.constant 32 : index
    %c0_105 = arith.constant 0 : index
    %138 = vector.load %arg18[%c32_104, %c0_105] : memref<36x512xf32, #tpu.memory_space<vmem>>, vector<4x512xf32>
    tpu.vector_store %arg18[%c32_104, %c0_105], %137 {strides = array<i32>} : memref<36x512xf32, #tpu.memory_space<vmem>>, vector<4x512xf32>,
    %c0_106 = arith.constant 0 : index
    %c0_107 = arith.constant 0 : index
    %139 = vector.load %arg10[%c0_106, %c0_107] : memref<4x36xf32, #tpu.memory_space<vmem>>, vector<4x36xf32>
    %c0_108 = arith.constant 0 : index
    %c0_109 = arith.constant 0 : index
    %140 = vector.load %arg18[%c0_108, %c0_109] : memref<36x512xf32, #tpu.memory_space<vmem>>, vector<36x512xf32>
    %cst_110 = arith.constant dense<0.000000e+00> : vector<4x512xf32>
    %141 = tpu.matmul %139, %140, %cst_110 {dimension_numbers = #tpu.dot_dimension_numbers<[1], [0], [0], [1], [0, 0, 1, 1], [], []>} : vector<4x36xf32>, vector<36x512xf32>, vector<4x512xf32> -> vector<4x512xf32>
    %c0_111 = arith.constant 0 : index
    %c0_112 = arith.constant 0 : index
    %142 = vector.load %arg11[%c0_111, %c0_112] : memref<4x1xf32, #tpu.memory_space<vmem>>, vector<4x1xf32>
    %143 = vector.broadcast %142 : vector<4x1xf32> to vector<4x512xf32>
    %144 = arith.addf %141, %143 : vector<4x512xf32>
    %cst_113 = arith.constant dense<0.000000e+00> : vector<4xf32>
    %145 = vector.multi_reduction <add>, %144, %cst_113 [1] : vector<4x512xf32> to vector<4xf32>
    %146 = vector.shape_cast %145 : vector<4xf32> to vector<4x1xf32>
    %cst_114 = arith.constant 5.120000e+02 : f32
    %147 = vector.broadcast %cst_114 : f32 to vector<4x1xf32>
    %148 = arith.divf %146, %147 : vector<4x1xf32>
    %149 = vector.broadcast %148 : vector<4x1xf32> to vector<4x512xf32>
    %150 = arith.subf %144, %149 : vector<4x512xf32>
    %151 = arith.mulf %150, %150 : vector<4x512xf32>
    %cst_115 = arith.constant dense<0.000000e+00> : vector<4xf32>
    %152 = vector.multi_reduction <add>, %151, %cst_115 [1] : vector<4x512xf32> to vector<4xf32>
    %153 = vector.shape_cast %152 : vector<4xf32> to vector<4x1xf32>
    %cst_116 = arith.constant 5.120000e+02 : f32
    %154 = vector.broadcast %cst_116 : f32 to vector<4x1xf32>
    %155 = arith.divf %153, %154 : vector<4x1xf32>
    %cst_117 = arith.constant 9.99999974E-6 : f32
    %156 = vector.broadcast %cst_117 : f32 to vector<4x1xf32>
    %157 = arith.addf %155, %156 : vector<4x1xf32>
    %158 = math.rsqrt %157 : vector<4x1xf32>
    %159 = vector.broadcast %158 : vector<4x1xf32> to vector<4x512xf32>
    %160 = arith.mulf %150, %159 : vector<4x512xf32>
    %c0_118 = arith.constant 0 : index
    %c0_119 = arith.constant 0 : index
    %161 = vector.load %arg12[%c0_118, %c0_119] : memref<4x1xf32, #tpu.memory_space<vmem>>, vector<4x1xf32>
    %162 = vector.broadcast %161 : vector<4x1xf32> to vector<4x512xf32>
    %163 = arith.mulf %160, %162 : vector<4x512xf32>
    %c0_120 = arith.constant 0 : index
    %c0_121 = arith.constant 0 : index
    %164 = vector.load %arg13[%c0_120, %c0_121] : memref<4x1xf32, #tpu.memory_space<vmem>>, vector<4x1xf32>
    %165 = vector.broadcast %164 : vector<4x1xf32> to vector<4x512xf32>
    %166 = arith.addf %163, %165 : vector<4x512xf32>
    %cst_122 = arith.constant 0.000000e+00 : f32
    %167 = vector.broadcast %cst_122 : f32 to vector<4x512xf32>
    %168 = arith.maximumf %166, %167 : vector<4x512xf32>
    %c0_123 = arith.constant 0 : index
    %c0_124 = arith.constant 0 : index
    %169 = vector.load %arg14[%c0_123, %c0_124] : memref<4x512xf32, #tpu.memory_space<vmem>>, vector<4x512xf32>
    tpu.vector_store %arg14[%c0_123, %c0_124], %168 {strides = array<i32>} : memref<4x512xf32, #tpu.memory_space<vmem>>, vector<4x512xf32>,
    return
  }
}

</mosaic_0001>

<llo_original>
// kernel: decoder_block_forward.1
$region0: #{decoder_block_forward.1}
  #allocation0 [shape = 'u32[]', space=smem, size = 0x4, offset = 0x4, fixed_abs, tag = 'smem constant byte address 0x4 - core index']
  #allocation1 [shape = 'u32[144,128]{1,0:T(1,128)}', space=vmem, size = 0x12000, scoped, tag = 'internal scratch']
  #allocation2 [shape = 'f32[8,512]{1,0:T(8,128)}', space=vmem, size = 0x4000, scoped, tag = 'scratch operand']
  #allocation3 [shape = 'f32[32,512]{1,0:T(8,128)}', space=vmem, size = 0x10000, scoped, tag = 'scratch operand']
  #allocation4 [shape = 'f32[72,512]{1,0:T(8,128)}', space=vmem, size = 0x24000, scoped, tag = 'scratch operand']
  #allocation5 [shape = 'f32[36,512]{1,0:T(8,128)}', space=vmem, size = 0x14000, scoped, tag = 'scratch operand']
  %s0 = inlined_call_operand.vmem [shape: f32[8,512], index: 0, kind: input, shape index: {}]
  %s1 = inlined_call_operand.vmem [shape: f32[4,512], index: 1, kind: input, shape index: {}]
  %s2 = inlined_call_operand.vmem [shape: f32[4,512], index: 2, kind: input, shape index: {}]
  %s3 = inlined_call_operand.vmem [shape: f32[9,512], index: 3, kind: input, shape index: {}]
  %s4 = inlined_call_operand.vmem [shape: f32[4,32], index: 4, kind: input, shape index: {}]
  %s5 = inlined_call_operand.vmem [shape: f32[4,1], index: 5, kind: input, shape index: {}]
  %s6 = inlined_call_operand.vmem [shape: f32[4,72], index: 6, kind: input, shape index: {}]
  %s7 = inlined_call_operand.vmem [shape: f32[4,1], index: 7, kind: input, shape index: {}]
  %s8 = inlined_call_operand.vmem [shape: f32[4,1], index: 8, kind: input, shape index: {}]
  %s9 = inlined_call_operand.vmem [shape: f32[4,1], index: 9, kind: input, shape index: {}]
  %s10 = inlined_call_operand.vmem [shape: f32[4,36], index: 10, kind: input, shape index: {}]
  %s11 = inlined_call_operand.vmem [shape: f32[4,1], index: 11, kind: input, shape index: {}]
  %s12 = inlined_call_operand.vmem [shape: f32[4,1], index: 12, kind: input, shape index: {}]
  %s13 = inlined_call_operand.vmem [shape: f32[4,1], index: 13, kind: input, shape index: {}]
  %s14 = inlined_call_operand.vmem [shape: f32[4,512], index: 14, kind: output, shape index: {}]
  %s15 = sld [smem:[#allocation0]]
  $region66: #{decoder_block_forward.1} parent=0
    _
  %s17 = ssub.s32 1, %s15
  %s18 = scalar_select 0, %s17, %s15
  // Predicated region
  $region2: #{decoder_block_forward.1} parent=0 // pred_check
    _
  $region3: #{decoder_block_forward.1} parent=0 // pred_check_branch
    %20 = sbr.rel (0) target = $region5
  $region4: #{decoder_block_forward.1} parent=0 // pred_region
    _
  $region5: #{decoder_block_forward.1} parent=0 // pred_fallthru
    _
  // Predicated region
  $region6: #{decoder_block_forward.1} parent=0 // pred_check
    _
  $region7: #{decoder_block_forward.1} parent=0 // pred_check_branch
    %22 = sbr.rel (0) target = $region9
  $region8: #{decoder_block_forward.1} parent=0 // pred_region
    _
  $region9: #{decoder_block_forward.1} parent=0 // pred_fallthru
    _
  // Predicated region
  $region10: #{decoder_block_forward.1} parent=0 // pred_check
    _
  $region11: #{decoder_block_forward.1} parent=0 // pred_check_branch
    %24 = sbr.rel (0) target = $region13
  $region12: #{decoder_block_forward.1} parent=0 // pred_region
    _
  $region13: #{decoder_block_forward.1} parent=0 // pred_fallthru
    _
  // Predicated region
  $region14: #{decoder_block_forward.1} parent=0 // pred_check
    _
  $region15: #{decoder_block_forward.1} parent=0 // pred_check_branch
    %26 = sbr.rel (0) target = $region17
  $region16: #{decoder_block_forward.1} parent=0 // pred_region
    _
  $region17: #{decoder_block_forward.1} parent=0 // pred_fallthru
    _
  // Predicated region
  $region18: #{decoder_block_forward.1} parent=0 // pred_check
    _
  $region19: #{decoder_block_forward.1} parent=0 // pred_check_branch
    %28 = sbr.rel (0) target = $region21
  $region20: #{decoder_block_forward.1} parent=0 // pred_region
    _
  $region21: #{decoder_block_forward.1} parent=0 // pred_fallthru
    _
  // Predicated region
  $region22: #{decoder_block_forward.1} parent=0 // pred_check
    _
  $region23: #{decoder_block_forward.1} parent=0 // pred_check_branch
    %30 = sbr.rel (0) target = $region25
  $region24: #{decoder_block_forward.1} parent=0 // pred_region
    _
  $region25: #{decoder_block_forward.1} parent=0 // pred_fallthru
    _
  // Predicated region
  $region26: #{decoder_block_forward.1} parent=0 // pred_check
    _
  $region27: #{decoder_block_forward.1} parent=0 // pred_check_branch
    %32 = sbr.rel (0) target = $region29
  $region28: #{decoder_block_forward.1} parent=0 // pred_region
    _
  $region29: #{decoder_block_forward.1} parent=0 // pred_fallthru
    _
  // Predicated region
  $region30: #{decoder_block_forward.1} parent=0 // pred_check
    _
  $region31: #{decoder_block_forward.1} parent=0 // pred_check_branch
    %34 = sbr.rel (0) target = $region33
  $region32: #{decoder_block_forward.1} parent=0 // pred_region
    _
  $region33: #{decoder_block_forward.1} parent=0 // pred_fallthru
    _
  // Predicated region
  $region34: #{decoder_block_forward.1} parent=0 // pred_check
    _
  $region35: #{decoder_block_forward.1} parent=0 // pred_check_branch
    %36 = sbr.rel (0) target = $region37
  $region36: #{decoder_block_forward.1} parent=0 // pred_region
    _
  $region37: #{decoder_block_forward.1} parent=0 // pred_fallthru
    _
  // Predicated region
  $region38: #{decoder_block_forward.1} parent=0 // pred_check
    _
  $region39: #{decoder_block_forward.1} parent=0 // pred_check_branch
    %38 = sbr.rel (0) target = $region41
  $region40: #{decoder_block_forward.1} parent=0 // pred_region
    _
  $region41: #{decoder_block_forward.1} parent=0 // pred_fallthru
    _
  // Predicated region
  $region42: #{decoder_block_forward.1} parent=0 // pred_check
    _
  $region43: #{decoder_block_forward.1} parent=0 // pred_check_branch
    %40 = sbr.rel (0) target = $region45
  $region44: #{decoder_block_forward.1} parent=0 // pred_region
    _
  $region45: #{decoder_block_forward.1} parent=0 // pred_fallthru
    _
  // Predicated region
  $region46: #{decoder_block_forward.1} parent=0 // pred_check
    _
  $region47: #{decoder_block_forward.1} parent=0 // pred_check_branch
    %42 = sbr.rel (0) target = $region49
  $region48: #{decoder_block_forward.1} parent=0 // pred_region
    _
  $region49: #{decoder_block_forward.1} parent=0 // pred_fallthru
    _
  // Predicated region
  $region50: #{decoder_block_forward.1} parent=0 // pred_check
    _
  $region51: #{decoder_block_forward.1} parent=0 // pred_check_branch
    %44 = sbr.rel (0) target = $region53
  $region52: #{decoder_block_forward.1} parent=0 // pred_region
    _
  $region53: #{decoder_block_forward.1} parent=0 // pred_fallthru
    _
  // Predicated region
  $region54: #{decoder_block_forward.1} parent=0 // pred_check
    _
  $region55: #{decoder_block_forward.1} parent=0 // pred_check_branch
    %46 = sbr.rel (0) target = $region57
  $region56: #{decoder_block_forward.1} parent=0 // pred_region
    _
  $region57: #{decoder_block_forward.1} parent=0 // pred_fallthru
    _
  %v47 = vld [vmem:[%s0] sm:$0xff]
  %v48 = vld [vmem:[%s0 + $0x8] sm:$0xff]
  %v49 = vld [vmem:[%s0 + $0x10] sm:$0xff]
  %v50 = vld [vmem:[%s0 + $0x18] sm:$0xff]
  %v51 = vld [vmem:[%s2] ss:$4 sm:$0xf]
  %v53 = vlaneseq
  %v54 = vshrl.u32 %v53, 7
  %v55 = vsub.s32 0, %v54
  %v56 = vrot.slane %v51, %v55
  %v57 = vlaneseq
  %v58 = vshrl.u32 %v57, 7
  %v59 = vsub.s32 1, %v58
  %v60 = vrot.slane %v51, %v59
  %v61 = vlaneseq
  %v62 = vshrl.u32 %v61, 7
  %v63 = vsub.s32 2, %v62
  %v64 = vrot.slane %v51, %v63
  %v65 = vlaneseq
  %v66 = vshrl.u32 %v65, 7
  %v67 = vsub.s32 3, %v66
  %v68 = vrot.slane %v51, %v67
  %v73 = vmul.f32 %v47, %v56
  %v74 = vmul.f32 %v48, %v60
  %v75 = vmul.f32 %v49, %v64
  %v76 = vmul.f32 %v50, %v68
  %77 = vst [vmem:[#allocation3] sm:$0xff] %v73
  %78 = vst [vmem:[#allocation3 + $0x8] sm:$0xff] %v74
  %79 = vst [vmem:[#allocation3 + $0x10] sm:$0xff] %v75
  %80 = vst [vmem:[#allocation3 + $0x18] sm:$0xff] %v76
  %s81 = scalar_lea.vmem %s2, 1
  %v82 = vld [vmem:[%s81] ss:$4 sm:$0xf]
  %v84 = vlaneseq
  %v85 = vshrl.u32 %v84, 7
  %v86 = vsub.s32 0, %v85
  %v87 = vrot.slane %v82, %v86
  %v88 = vlaneseq
  %v89 = vshrl.u32 %v88, 7
  %v90 = vsub.s32 1, %v89
  %v91 = vrot.slane %v82, %v90
  %v92 = vlaneseq
  %v93 = vshrl.u32 %v92, 7
  %v94 = vsub.s32 2, %v93
  %v95 = vrot.slane %v82, %v94
  %v96 = vlaneseq
  %v97 = vshrl.u32 %v96, 7
  %v98 = vsub.s32 3, %v97
  %v99 = vrot.slane %v82, %v98
  %v104 = vmul.f32 %v47, %v87
  %v105 = vmul.f32 %v48, %v91
  %v106 = vmul.f32 %v49, %v95
  %v107 = vmul.f32 %v50, %v99
  %108 = vst [vmem:[#allocation3 + $0x20] sm:$0xff] %v104
  %109 = vst [vmem:[#allocation3 + $0x28] sm:$0xff] %v105
  %110 = vst [vmem:[#allocation3 + $0x30] sm:$0xff] %v106
  %111 = vst [vmem:[#allocation3 + $0x38] sm:$0xff] %v107
  %s112 = scalar_lea.vmem %s2, 2
  %v113 = vld [vmem:[%s112] ss:$4 sm:$0xf]
  %v115 = vlaneseq
  %v116 = vshrl.u32 %v115, 7
  %v117 = vsub.s32 0, %v116
  %v118 = vrot.slane %v113, %v117
  %v119 = vlaneseq
  %v120 = vshrl.u32 %v119, 7
  %v121 = vsub.s32 1, %v120
  %v122 = vrot.slane %v113, %v121
  %v123 = vlaneseq
  %v124 = vshrl.u32 %v123, 7
  %v125 = vsub.s32 2, %v124
  %v126 = vrot.slane %v113, %v125
  %v127 = vlaneseq
  %v128 = vshrl.u32 %v127, 7
  %v129 = vsub.s32 3, %v128
  %v130 = vrot.slane %v113, %v129
  %v135 = vmul.f32 %v47, %v118
  %v136 = vmul.f32 %v48, %v122
  %v137 = vmul.f32 %v49, %v126
  %v138 = vmul.f32 %v50, %v130
  %139 = vst [vmem:[#allocation3 + $0x40] sm:$0xff] %v135
  %140 = vst [vmem:[#allocation3 + $0x48] sm:$0xff] %v136
  %141 = vst [vmem:[#allocation3 + $0x50] sm:$0xff] %v137
  %142 = vst [vmem:[#allocation3 + $0x58] sm:$0xff] %v138
  %s143 = scalar_lea.vmem %s2, 3
  %v144 = vld [vmem:[%s143] ss:$4 sm:$0xf]
  %v146 = vlaneseq
  %v147 = vshrl.u32 %v146, 7
  %v148 = vsub.s32 0, %v147
  %v149 = vrot.slane %v144, %v148
  %v150 = vlaneseq
  %v151 = vshrl.u32 %v150, 7
  %v152 = vsub.s32 1, %v151
  %v153 = vrot.slane %v144, %v152
  %v154 = vlaneseq
  %v155 = vshrl.u32 %v154, 7
  %v156 = vsub.s32 2, %v155
  %v157 = vrot.slane %v144, %v156
  %v158 = vlaneseq
  %v159 = vshrl.u32 %v158, 7
  %v160 = vsub.s32 3, %v159
  %v161 = vrot.slane %v144, %v160
  %v166 = vmul.f32 %v47, %v149
  %v167 = vmul.f32 %v48, %v153
  %v168 = vmul.f32 %v49, %v157
  %v169 = vmul.f32 %v50, %v161
  %170 = vst [vmem:[#allocation3 + $0x60] sm:$0xff] %v166
  %171 = vst [vmem:[#allocation3 + $0x68] sm:$0xff] %v167
  %172 = vst [vmem:[#allocation3 + $0x70] sm:$0xff] %v168
  %173 = vst [vmem:[#allocation3 + $0x78] sm:$0xff] %v169
  %v174 = vld [vmem:[%s4] sm:$0xf]
  %v175 = vld [vmem:[#allocation3] sm:$0xff]
  %v176 = vld [vmem:[#allocation3 + $0x8] sm:$0xff]
  %v177 = vld [vmem:[#allocation3 + $0x10] sm:$0xff]
  %v178 = vld [vmem:[#allocation3 + $0x18] sm:$0xff]
  %v179 = vld [vmem:[#allocation3 + $0x20] sm:$0xff]
  %v180 = vld [vmem:[#allocation3 + $0x28] sm:$0xff]
  %v181 = vld [vmem:[#allocation3 + $0x30] sm:$0xff]
  %v182 = vld [vmem:[#allocation3 + $0x38] sm:$0xff]
  %v183 = vld [vmem:[#allocation3 + $0x40] sm:$0xff]
  %v184 = vld [vmem:[#allocation3 + $0x48] sm:$0xff]
  %v185 = vld [vmem:[#allocation3 + $0x50] sm:$0xff]
  %v186 = vld [vmem:[#allocation3 + $0x58] sm:$0xff]
  %v187 = vld [vmem:[#allocation3 + $0x60] sm:$0xff]
  %v188 = vld [vmem:[#allocation3 + $0x68] sm:$0xff]
  %v189 = vld [vmem:[#allocation3 + $0x70] sm:$0xff]
  %v190 = vld [vmem:[#allocation3 + $0x78] sm:$0xff]
  %v191 = vld [vmem:[%s5] sm:$0xf]
  %193 = vset.pattern.permute.xlu0 0
  %194 = vperm.xlu0 %193, %v191
  %v195 = vpop.permute.xlu0 %194
  %vm197 = vcmask 261120
  %v199 = vsel %vm197, %v174, 0
  %201 = vmatprep.subr.mxu0 0.0
  %202 = vmatpush1.msra.mxu0 0.0
  %203 = vmatprep.subr.mxu0 0.0
  %204 = vmatpush1.msra.mxu0 0.0
  %205 = vmatprep.subr.mxu0 0.0
  %206 = vmatpush1.msra.mxu0 0.0
  %207 = vmatprep.subr.mxu0 0.0
  %208 = vmatpush1.msra.mxu0 0.0
  %209 = vmatprep.subr.mxu0 0.0
  %210 = vmatpush1.msra.mxu0 0.0
  %211 = vmatprep.subr.mxu0 0.0
  %212 = vmatpush1.msra.mxu0 0.0
  %213 = vmatprep.subr.mxu0 0.0
  %214 = vmatpush1.msra.mxu0 0.0
  %215 = vmatprep.subr.mxu0 0.0
  %216 = vmatpush1.msra.mxu0 0.0
  %217 = vmatprep.subr.mxu0 0.0
  %218 = vmatpush1.msra.mxu0 0.0
  %219 = vmatprep.subr.mxu0 0.0
  %220 = vmatpush1.msra.mxu0 0.0
  %221 = vmatprep.subr.mxu0 0.0
  %222 = vmatpush1.msra.mxu0 0.0
  %223 = vmatprep.subr.mxu0 0.0
  %224 = vmatpush1.msra.mxu0 0.0
  %225 = vmatprep.subr.mxu0 %v188
  %226 = vmatpush1.msra.mxu0 %v187
  %227 = vmatprep.subr.mxu0 %v184
  %228 = vmatpush1.msra.mxu0 %v183
  %229 = vmatprep.subr.mxu0 %v180
  %230 = vmatpush1.msra.mxu0 %v179
  %231 = vmatprep.subr.mxu0 %v176
  %232 = vmatpush1.msra.mxu0 %v175
  %233 = vmatprep.subr.mxu0 0.0
  %234 = vmatpush2.msra.mxu0 0.0
  %235 = vmatprep.subr.mxu0 0.0
  %236 = vmatpush2.msra.mxu0 0.0
  %237 = vmatprep.subr.mxu0 0.0
  %238 = vmatpush2.msra.mxu0 0.0
  %239 = vmatprep.subr.mxu0 0.0
  %240 = vmatpush2.msra.mxu0 0.0
  %241 = vmatprep.subr.mxu0 0.0
  %242 = vmatpush2.msra.mxu0 0.0
  %243 = vmatprep.subr.mxu0 0.0
  %244 = vmatpush2.msra.mxu0 0.0
  %245 = vmatprep.subr.mxu0 0.0
  %246 = vmatpush2.msra.mxu0 0.0
  %247 = vmatprep.subr.mxu0 0.0
  %248 = vmatpush2.msra.mxu0 0.0
  %249 = vmatprep.subr.mxu0 0.0
  %250 = vmatpush2.msra.mxu0 0.0
  %251 = vmatprep.subr.mxu0 0.0
  %252 = vmatpush2.msra.mxu0 0.0
  %253 = vmatprep.subr.mxu0 0.0
  %254 = vmatpush2.msra.mxu0 0.0
  %255 = vmatprep.subr.mxu0 0.0
  %256 = vmatpush2.msra.mxu0 0.0
  %257 = vmatprep.subr.mxu0 0.0
  %258 = vmatpush2.msra.mxu0 0.0
  %259 = vmatprep.subr.mxu0 0.0
  %260 = vmatpush2.msra.mxu0 0.0
  %261 = vmatprep.subr.mxu0 0.0
  %262 = vmatpush2.msra.mxu0 0.0
  %263 = vmatprep.subr.mxu0 0.0
  %264 = vmatpush2.msra.mxu0 0.0
  %265 = vmatprep.mubr.f32.mxu0 0.0
  %266 = vmatmul.mubr.f32.gmra.mxu0 %v199
  %v267 = vpop.f32.mrf.mxu0
  %v268 = vadd.f32 %v195, %v267
  %v269 = vpop.f32.mrf.mxu0
  %v270 = vadd.f32 %v195, %v269
  %271 = vdwg.mxu0
  %272 = vmatprep.subr.mxu0 0.0
  %273 = vmatpush1.msra.mxu0 0.0
  %274 = vmatprep.subr.mxu0 0.0
  %275 = vmatpush1.msra.mxu0 0.0
  %276 = vmatprep.subr.mxu0 0.0
  %277 = vmatpush1.msra.mxu0 0.0
  %278 = vmatprep.subr.mxu0 0.0
  %279 = vmatpush1.msra.mxu0 0.0
  %280 = vmatprep.subr.mxu0 0.0
  %281 = vmatpush1.msra.mxu0 0.0
  %282 = vmatprep.subr.mxu0 0.0
  %283 = vmatpush1.msra.mxu0 0.0
  %284 = vmatprep.subr.mxu0 0.0
  %285 = vmatpush1.msra.mxu0 0.0
  %286 = vmatprep.subr.mxu0 0.0
  %287 = vmatpush1.msra.mxu0 0.0
  %288 = vmatprep.subr.mxu0 0.0
  %289 = vmatpush1.msra.mxu0 0.0
  %290 = vmatprep.subr.mxu0 0.0
  %291 = vmatpush1.msra.mxu0 0.0
  %292 = vmatprep.subr.mxu0 0.0
  %293 = vmatpush1.msra.mxu0 0.0
  %294 = vmatprep.subr.mxu0 0.0
  %295 = vmatpush1.msra.mxu0 0.0
  %296 = vmatprep.subr.mxu0 %v190
  %297 = vmatpush1.msra.mxu0 %v189
  %298 = vmatprep.subr.mxu0 %v186
  %299 = vmatpush1.msra.mxu0 %v185
  %300 = vmatprep.subr.mxu0 %v182
  %301 = vmatpush1.msra.mxu0 %v181
  %302 = vmatprep.subr.mxu0 %v178
  %303 = vmatpush1.msra.mxu0 %v177
  %304 = vmatprep.subr.mxu0 0.0
  %305 = vmatpush2.msra.mxu0 0.0
  %306 = vmatprep.subr.mxu0 0.0
  %307 = vmatpush2.msra.mxu0 0.0
  %308 = vmatprep.subr.mxu0 0.0
  %309 = vmatpush2.msra.mxu0 0.0
  %310 = vmatprep.subr.mxu0 0.0
  %311 = vmatpush2.msra.mxu0 0.0
  %312 = vmatprep.subr.mxu0 0.0
  %313 = vmatpush2.msra.mxu0 0.0
  %314 = vmatprep.subr.mxu0 0.0
  %315 = vmatpush2.msra.mxu0 0.0
  %316 = vmatprep.subr.mxu0 0.0
  %317 = vmatpush2.msra.mxu0 0.0
  %318 = vmatprep.subr.mxu0 0.0
  %319 = vmatpush2.msra.mxu0 0.0
  %320 = vmatprep.subr.mxu0 0.0
  %321 = vmatpush2.msra.mxu0 0.0
  %322 = vmatprep.subr.mxu0 0.0
  %323 = vmatpush2.msra.mxu0 0.0
  %324 = vmatprep.subr.mxu0 0.0
  %325 = vmatpush2.msra.mxu0 0.0
  %326 = vmatprep.subr.mxu0 0.0
  %327 = vmatpush2.msra.mxu0 0.0
  %328 = vmatprep.subr.mxu0 0.0
  %329 = vmatpush2.msra.mxu0 0.0
  %330 = vmatprep.subr.mxu0 0.0
  %331 = vmatpush2.msra.mxu0 0.0
  %332 = vmatprep.subr.mxu0 0.0
  %333 = vmatpush2.msra.mxu0 0.0
  %334 = vmatprep.subr.mxu0 0.0
  %335 = vmatpush2.msra.mxu0 0.0
  %336 = vmatprep.mubr.f32.mxu0 0.0
  %337 = vmatmul.mubr.f32.gmra.mxu0 %v199
  %v338 = vpop.f32.mrf.mxu0
  %v339 = vadd.f32 %v195, %v338
  %v340 = vpop.f32.mrf.mxu0
  %v341 = vadd.f32 %v195, %v340
  %342 = vdwg.mxu0
  %v343 = vld [vmem:[%s1] sm:$0xff]
  %v344 = vld [vmem:[%s1 + $0x8] sm:$0xff]
  %v347 = vcombine.high %v343, %v343
  %v348 = vcombine.high %v344, %v344
  %351 = vst [vmem:[#allocation2] sm:$0xf] %v343
  %352 = vst [vmem:[#allocation2 + $0x8] sm:$0xf] %v347
  %353 = vst [vmem:[#allocation2 + $0x10] sm:$0xf] %v344
  %354 = vst [vmem:[#allocation2 + $0x18] sm:$0xf] %v348
  %v359 = vrot.slane %v268, 4
  %v360 = vrot.slane %v270, 4
  %v361 = vrot.slane %v339, 4
  %v362 = vrot.slane %v341, 4
  %367 = vst [vmem:[#allocation2] sm:$0xf0] %v359
  %368 = vst [vmem:[#allocation2 + $0x8] sm:$0xf0] %v360
  %369 = vst [vmem:[#allocation2 + $0x10] sm:$0xf0] %v361
  %370 = vst [vmem:[#allocation2 + $0x18] sm:$0xf0] %v362
  %v371 = vld [vmem:[#allocation2] sm:$0xff]
  %v372 = vld [vmem:[#allocation2 + $0x8] sm:$0xff]
  %v373 = vld [vmem:[#allocation2 + $0x10] sm:$0xff]
  %v374 = vld [vmem:[#allocation2 + $0x18] sm:$0xff]
  %375 = vrot.lane.b32.xlu0 %v371, 17
  %v376 = vpop.permute.xlu0 %375
  %377 = vrot.lane.b32.xlu0 %v372, 17
  %v378 = vpop.permute.xlu0 %377
  %379 = vrot.lane.b32.xlu0 %v373, 17
  %v380 = vpop.permute.xlu0 %379
  %381 = vrot.lane.b32.xlu0 %v374, 17
  %v382 = vpop.permute.xlu0 %381
  %v383 = vlaneseq
  %v384 = vand.u32 %v383, 127
  %vm385 = vcmp.lt.s32.totalorder %v384, 17
  %v386 = vsel %vm385, %v380, %v382
  %v387 = vsel %vm385, %v378, %v380
  %v388 = vsel %vm385, %v376, %v378
  %v389 = vsel %vm385, %v382, %v376
  %v390 = vld [vmem:[%s3] ss:$8 sm:$0xf]
  %v392 = vlaneseq
  %v393 = vshrl.u32 %v392, 7
  %v394 = vsub.s32 0, %v393
  %v395 = vrot.slane %v390, %v394
  %v396 = vlaneseq
  %v397 = vshrl.u32 %v396, 7
  %v398 = vsub.s32 1, %v397
  %v399 = vrot.slane %v390, %v398
  %v400 = vlaneseq
  %v401 = vshrl.u32 %v400, 7
  %v402 = vsub.s32 2, %v401
  %v403 = vrot.slane %v390, %v402
  %v404 = vlaneseq
  %v405 = vshrl.u32 %v404, 7
  %v406 = vsub.s32 3, %v405
  %v407 = vrot.slane %v390, %v406
  %v412 = vmul.f32 %v389, %v395
  %v413 = vmul.f32 %v388, %v399
  %v414 = vmul.f32 %v387, %v403
  %v415 = vmul.f32 %v386, %v407
  %416 = vst [vmem:[#allocation4] sm:$0xff] %v412
  %417 = vst [vmem:[#allocation4 + $0x8] sm:$0xff] %v413
  %418 = vst [vmem:[#allocation4 + $0x10] sm:$0xff] %v414
  %419 = vst [vmem:[#allocation4 + $0x18] sm:$0xff] %v415
  %420 = vrot.lane.b32.xlu0 %v371, 16
  %v421 = vpop.permute.xlu0 %420
  %422 = vrot.lane.b32.xlu0 %v372, 16
  %v423 = vpop.permute.xlu0 %422
  %424 = vrot.lane.b32.xlu0 %v373, 16
  %v425 = vpop.permute.xlu0 %424
  %426 = vrot.lane.b32.xlu0 %v374, 16
  %v427 = vpop.permute.xlu0 %426
  %vm428 = vcmp.lt.s32.totalorder %v384, 16
  %v429 = vsel %vm428, %v425, %v427
  %v430 = vsel %vm428, %v423, %v425
  %v431 = vsel %vm428, %v421, %v423
  %v432 = vsel %vm428, %v427, %v421
  %s433 = scalar_lea.vmem %s3, 1
  %v434 = vld [vmem:[%s433] ss:$8 sm:$0xf]
  %v436 = vlaneseq
  %v437 = vshrl.u32 %v436, 7
  %v438 = vsub.s32 0, %v437
  %v439 = vrot.slane %v434, %v438
  %v440 = vlaneseq
  %v441 = vshrl.u32 %v440, 7
  %v442 = vsub.s32 1, %v441
  %v443 = vrot.slane %v434, %v442
  %v444 = vlaneseq
  %v445 = vshrl.u32 %v444, 7
  %v446 = vsub.s32 2, %v445
  %v447 = vrot.slane %v434, %v446
  %v448 = vlaneseq
  %v449 = vshrl.u32 %v448, 7
  %v450 = vsub.s32 3, %v449
  %v451 = vrot.slane %v434, %v450
  %v456 = vmul.f32 %v432, %v439
  %v457 = vmul.f32 %v431, %v443
  %v458 = vmul.f32 %v430, %v447
  %v459 = vmul.f32 %v429, %v451
  %460 = vst [vmem:[#allocation4 + $0x20] sm:$0xff] %v456
  %461 = vst [vmem:[#allocation4 + $0x28] sm:$0xff] %v457
  %462 = vst [vmem:[#allocation4 + $0x30] sm:$0xff] %v458
  %463 = vst [vmem:[#allocation4 + $0x38] sm:$0xff] %v459
  %464 = vrot.lane.b32.xlu0 %v371, 15
  %v465 = vpop.permute.xlu0 %464
  %466 = vrot.lane.b32.xlu0 %v372, 15
  %v467 = vpop.permute.xlu0 %466
  %468 = vrot.lane.b32.xlu0 %v373, 15
  %v469 = vpop.permute.xlu0 %468
  %470 = vrot.lane.b32.xlu0 %v374, 15
  %v471 = vpop.permute.xlu0 %470
  %vm472 = vcmp.lt.s32.totalorder %v384, 15
  %v473 = vsel %vm472, %v469, %v471
  %v474 = vsel %vm472, %v467, %v469
  %v475 = vsel %vm472, %v465, %v467
  %v476 = vsel %vm472, %v471, %v465
  %s477 = scalar_lea.vmem %s3, 2
  %v478 = vld [vmem:[%s477] ss:$8 sm:$0xf]
  %v480 = vlaneseq
  %v481 = vshrl.u32 %v480, 7
  %v482 = vsub.s32 0, %v481
  %v483 = vrot.slane %v478, %v482
  %v484 = vlaneseq
  %v485 = vshrl.u32 %v484, 7
  %v486 = vsub.s32 1, %v485
  %v487 = vrot.slane %v478, %v486
  %v488 = vlaneseq
  %v489 = vshrl.u32 %v488, 7
  %v490 = vsub.s32 2, %v489
  %v491 = vrot.slane %v478, %v490
  %v492 = vlaneseq
  %v493 = vshrl.u32 %v492, 7
  %v494 = vsub.s32 3, %v493
  %v495 = vrot.slane %v478, %v494
  %v500 = vmul.f32 %v476, %v483
  %v501 = vmul.f32 %v475, %v487
  %v502 = vmul.f32 %v474, %v491
  %v503 = vmul.f32 %v473, %v495
  %504 = vst [vmem:[#allocation4 + $0x40] sm:$0xff] %v500
  %505 = vst [vmem:[#allocation4 + $0x48] sm:$0xff] %v501
  %506 = vst [vmem:[#allocation4 + $0x50] sm:$0xff] %v502
  %507 = vst [vmem:[#allocation4 + $0x58] sm:$0xff] %v503
  %508 = vrot.lane.b32.xlu0 %v371, 1
  %v509 = vpop.permute.xlu0 %508
  %510 = vrot.lane.b32.xlu0 %v372, 1
  %v511 = vpop.permute.xlu0 %510
  %512 = vrot.lane.b32.xlu0 %v373, 1
  %v513 = vpop.permute.xlu0 %512
  %514 = vrot.lane.b32.xlu0 %v374, 1
  %v515 = vpop.permute.xlu0 %514
  %vm516 = vcmp.lt.s32.totalorder %v384, 1
  %v517 = vsel %vm516, %v513, %v515
  %v518 = vsel %vm516, %v511, %v513
  %v519 = vsel %vm516, %v509, %v511
  %v520 = vsel %vm516, %v515, %v509
  %s521 = scalar_lea.vmem %s3, 3
  %v522 = vld [vmem:[%s521] ss:$8 sm:$0xf]
  %v524 = vlaneseq
  %v525 = vshrl.u32 %v524, 7
  %v526 = vsub.s32 0, %v525
  %v527 = vrot.slane %v522, %v526
  %v528 = vlaneseq
  %v529 = vshrl.u32 %v528, 7
  %v530 = vsub.s32 1, %v529
  %v531 = vrot.slane %v522, %v530
  %v532 = vlaneseq
  %v533 = vshrl.u32 %v532, 7
  %v534 = vsub.s32 2, %v533
  %v535 = vrot.slane %v522, %v534
  %v536 = vlaneseq
  %v537 = vshrl.u32 %v536, 7
  %v538 = vsub.s32 3, %v537
  %v539 = vrot.slane %v522, %v538
  %v544 = vmul.f32 %v520, %v527
  %v545 = vmul.f32 %v519, %v531
  %v546 = vmul.f32 %v518, %v535
  %v547 = vmul.f32 %v517, %v539
  %548 = vst [vmem:[#allocation4 + $0x60] sm:$0xff] %v544
  %549 = vst [vmem:[#allocation4 + $0x68] sm:$0xff] %v545
  %550 = vst [vmem:[#allocation4 + $0x70] sm:$0xff] %v546
  %551 = vst [vmem:[#allocation4 + $0x78] sm:$0xff] %v547
  %552 = vst [vmem:[#allocation4 + $0x80] sm:$0xff] %v371
  %553 = vst [vmem:[#allocation4 + $0x88] sm:$0xff] %v372
  %554 = vst [vmem:[#allocation4 + $0x90] sm:$0xff] %v373
  %555 = vst [vmem:[#allocation4 + $0x98] sm:$0xff] %v374
  %556 = vrot.lane.b32.xlu0 %v371, 127
  %v557 = vpop.permute.xlu0 %556
  %558 = vrot.lane.b32.xlu0 %v372, 127
  %v559 = vpop.permute.xlu0 %558
  %560 = vrot.lane.b32.xlu0 %v373, 127
  %v561 = vpop.permute.xlu0 %560
  %562 = vrot.lane.b32.xlu0 %v374, 127
  %v563 = vpop.permute.xlu0 %562
  %vm564 = vcmp.lt.s32.totalorder %v384, 127
  %v565 = vsel %vm564, %v561, %v563
  %v566 = vsel %vm564, %v559, %v561
  %v567 = vsel %vm564, %v557, %v559
  %v568 = vsel %vm564, %v563, %v557
  %s569 = scalar_lea.vmem %s3, 5
  %v570 = vld [vmem:[%s569] ss:$8 sm:$0xf]
  %v572 = vlaneseq
  %v573 = vshrl.u32 %v572, 7
  %v574 = vsub.s32 0, %v573
  %v575 = vrot.slane %v570, %v574
  %v576 = vlaneseq
  %v577 = vshrl.u32 %v576, 7
  %v578 = vsub.s32 1, %v577
  %v579 = vrot.slane %v570, %v578
  %v580 = vlaneseq
  %v581 = vshrl.u32 %v580, 7
  %v582 = vsub.s32 2, %v581
  %v583 = vrot.slane %v570, %v582
  %v584 = vlaneseq
  %v585 = vshrl.u32 %v584, 7
  %v586 = vsub.s32 3, %v585
  %v587 = vrot.slane %v570, %v586
  %v592 = vmul.f32 %v567, %v575
  %v593 = vmul.f32 %v566, %v579
  %v594 = vmul.f32 %v565, %v583
  %v595 = vmul.f32 %v568, %v587
  %596 = vst [vmem:[#allocation4 + $0xa0] sm:$0xff] %v592
  %597 = vst [vmem:[#allocation4 + $0xa8] sm:$0xff] %v593
  %598 = vst [vmem:[#allocation4 + $0xb0] sm:$0xff] %v594
  %599 = vst [vmem:[#allocation4 + $0xb8] sm:$0xff] %v595
  %600 = vrot.lane.b32.xlu0 %v371, 113
  %v601 = vpop.permute.xlu0 %600
  %602 = vrot.lane.b32.xlu0 %v372, 113
  %v603 = vpop.permute.xlu0 %602
  %604 = vrot.lane.b32.xlu0 %v373, 113
  %v605 = vpop.permute.xlu0 %604
  %606 = vrot.lane.b32.xlu0 %v374, 113
  %v607 = vpop.permute.xlu0 %606
  %vm608 = vcmp.lt.s32.totalorder %v384, 113
  %v609 = vsel %vm608, %v605, %v607
  %v610 = vsel %vm608, %v603, %v605
  %v611 = vsel %vm608, %v601, %v603
  %v612 = vsel %vm608, %v607, %v601
  %s613 = scalar_lea.vmem %s3, 6
  %v614 = vld [vmem:[%s613] ss:$8 sm:$0xf]
  %v616 = vlaneseq
  %v617 = vshrl.u32 %v616, 7
  %v618 = vsub.s32 0, %v617
  %v619 = vrot.slane %v614, %v618
  %v620 = vlaneseq
  %v621 = vshrl.u32 %v620, 7
  %v622 = vsub.s32 1, %v621
  %v623 = vrot.slane %v614, %v622
  %v624 = vlaneseq
  %v625 = vshrl.u32 %v624, 7
  %v626 = vsub.s32 2, %v625
  %v627 = vrot.slane %v614, %v626
  %v628 = vlaneseq
  %v629 = vshrl.u32 %v628, 7
  %v630 = vsub.s32 3, %v629
  %v631 = vrot.slane %v614, %v630
  %v636 = vmul.f32 %v611, %v619
  %v637 = vmul.f32 %v610, %v623
  %v638 = vmul.f32 %v609, %v627
  %v639 = vmul.f32 %v612, %v631
  %640 = vst [vmem:[#allocation4 + $0xc0] sm:$0xff] %v636
  %641 = vst [vmem:[#allocation4 + $0xc8] sm:$0xff] %v637
  %642 = vst [vmem:[#allocation4 + $0xd0] sm:$0xff] %v638
  %643 = vst [vmem:[#allocation4 + $0xd8] sm:$0xff] %v639
  %644 = vrot.lane.b32.xlu0 %v371, 112
  %v645 = vpop.permute.xlu0 %644
  %646 = vrot.lane.b32.xlu0 %v372, 112
  %v647 = vpop.permute.xlu0 %646
  %648 = vrot.lane.b32.xlu0 %v373, 112
  %v649 = vpop.permute.xlu0 %648
  %650 = vrot.lane.b32.xlu0 %v374, 112
  %v651 = vpop.permute.xlu0 %650
  %vm652 = vcmp.lt.s32.totalorder %v384, 112
  %v653 = vsel %vm652, %v649, %v651
  %v654 = vsel %vm652, %v647, %v649
  %v655 = vsel %vm652, %v645, %v647
  %v656 = vsel %vm652, %v651, %v645
  %s657 = scalar_lea.vmem %s3, 7
  %v658 = vld [vmem:[%s657] ss:$8 sm:$0xf]
  %v660 = vlaneseq
  %v661 = vshrl.u32 %v660, 7
  %v662 = vsub.s32 0, %v661
  %v663 = vrot.slane %v658, %v662
  %v664 = vlaneseq
  %v665 = vshrl.u32 %v664, 7
  %v666 = vsub.s32 1, %v665
  %v667 = vrot.slane %v658, %v666
  %v668 = vlaneseq
  %v669 = vshrl.u32 %v668, 7
  %v670 = vsub.s32 2, %v669
  %v671 = vrot.slane %v658, %v670
  %v672 = vlaneseq
  %v673 = vshrl.u32 %v672, 7
  %v674 = vsub.s32 3, %v673
  %v675 = vrot.slane %v658, %v674
  %v680 = vmul.f32 %v655, %v663
  %v681 = vmul.f32 %v654, %v667
  %v682 = vmul.f32 %v653, %v671
  %v683 = vmul.f32 %v656, %v675
  %684 = vst [vmem:[#allocation4 + $0xe0] sm:$0xff] %v680
  %685 = vst [vmem:[#allocation4 + $0xe8] sm:$0xff] %v681
  %686 = vst [vmem:[#allocation4 + $0xf0] sm:$0xff] %v682
  %687 = vst [vmem:[#allocation4 + $0xf8] sm:$0xff] %v683
  %688 = vrot.lane.b32.xlu0 %v371, 111
  %v689 = vpop.permute.xlu0 %688
  %690 = vrot.lane.b32.xlu0 %v372, 111
  %v691 = vpop.permute.xlu0 %690
  %692 = vrot.lane.b32.xlu0 %v373, 111
  %v693 = vpop.permute.xlu0 %692
  %694 = vrot.lane.b32.xlu0 %v374, 111
  %v695 = vpop.permute.xlu0 %694
  %vm696 = vcmp.lt.s32.totalorder %v384, 111
  %v697 = vsel %vm696, %v693, %v695
  %v698 = vsel %vm696, %v691, %v693
  %v699 = vsel %vm696, %v689, %v691
  %v700 = vsel %vm696, %v695, %v689
  %s701 = scalar_lea.vmem %s3, 32
  %v702 = vld [vmem:[%s701] ss:$8 sm:$0xf]
  %v704 = vlaneseq
  %v705 = vshrl.u32 %v704, 7
  %v706 = vsub.s32 0, %v705
  %v707 = vrot.slane %v702, %v706
  %v708 = vlaneseq
  %v709 = vshrl.u32 %v708, 7
  %v710 = vsub.s32 1, %v709
  %v711 = vrot.slane %v702, %v710
  %v712 = vlaneseq
  %v713 = vshrl.u32 %v712, 7
  %v714 = vsub.s32 2, %v713
  %v715 = vrot.slane %v702, %v714
  %v716 = vlaneseq
  %v717 = vshrl.u32 %v716, 7
  %v718 = vsub.s32 3, %v717
  %v719 = vrot.slane %v702, %v718
  %v724 = vmul.f32 %v699, %v707
  %v725 = vmul.f32 %v698, %v711
  %v726 = vmul.f32 %v697, %v715
  %v727 = vmul.f32 %v700, %v719
  %728 = vst [vmem:[#allocation4 + $0x100] sm:$0xff] %v724
  %729 = vst [vmem:[#allocation4 + $0x108] sm:$0xff] %v725
  %730 = vst [vmem:[#allocation4 + $0x110] sm:$0xff] %v726
  %731 = vst [vmem:[#allocation4 + $0x118] sm:$0xff] %v727
  %v732 = vld [vmem:[%s6] sm:$0xf]
  %v733 = vld [vmem:[#allocation4] sm:$0xff]
  %v734 = vld [vmem:[#allocation4 + $0x8] sm:$0xff]
  %v735 = vld [vmem:[#allocation4 + $0x10] sm:$0xff]
  %v736 = vld [vmem:[#allocation4 + $0x18] sm:$0xff]
  %v737 = vld [vmem:[#allocation4 + $0x20] sm:$0xff]
  %v738 = vld [vmem:[#allocation4 + $0x28] sm:$0xff]
  %v739 = vld [vmem:[#allocation4 + $0x30] sm:$0xff]
  %v740 = vld [vmem:[#allocation4 + $0x38] sm:$0xff]
  %v741 = vld [vmem:[#allocation4 + $0x40] sm:$0xff]
  %v742 = vld [vmem:[#allocation4 + $0x48] sm:$0xff]
  %v743 = vld [vmem:[#allocation4 + $0x50] sm:$0xff]
  %v744 = vld [vmem:[#allocation4 + $0x58] sm:$0xff]
  %v745 = vld [vmem:[#allocation4 + $0x60] sm:$0xff]
  %v746 = vld [vmem:[#allocation4 + $0x68] sm:$0xff]
  %v747 = vld [vmem:[#allocation4 + $0x70] sm:$0xff]
  %v748 = vld [vmem:[#allocation4 + $0x78] sm:$0xff]
  %v749 = vld [vmem:[#allocation4 + $0x80] sm:$0xff]
  %v750 = vld [vmem:[#allocation4 + $0x88] sm:$0xff]
  %v751 = vld [vmem:[#allocation4 + $0x90] sm:$0xff]
  %v752 = vld [vmem:[#allocation4 + $0x98] sm:$0xff]
  %v753 = vld [vmem:[#allocation4 + $0xa0] sm:$0xff]
  %v754 = vld [vmem:[#allocation4 + $0xa8] sm:$0xff]
  %v755 = vld [vmem:[#allocation4 + $0xb0] sm:$0xff]
  %v756 = vld [vmem:[#allocation4 + $0xb8] sm:$0xff]
  %v757 = vld [vmem:[#allocation4 + $0xc0] sm:$0xff]
  %v758 = vld [vmem:[#allocation4 + $0xc8] sm:$0xff]
  %v759 = vld [vmem:[#allocation4 + $0xd0] sm:$0xff]
  %v760 = vld [vmem:[#allocation4 + $0xd8] sm:$0xff]
  %v761 = vld [vmem:[#allocation4 + $0xe0] sm:$0xff]
  %v762 = vld [vmem:[#allocation4 + $0xe8] sm:$0xff]
  %v763 = vld [vmem:[#allocation4 + $0xf0] sm:$0xff]
  %v764 = vld [vmem:[#allocation4 + $0xf8] sm:$0xff]
  %v765 = vld [vmem:[#allocation4 + $0x100] sm:$0xff]
  %v766 = vld [vmem:[#allocation4 + $0x108] sm:$0xff]
  %v767 = vld [vmem:[#allocation4 + $0x110] sm:$0xff]
  %v768 = vld [vmem:[#allocation4 + $0x118] sm:$0xff]
  %v769 = vld [vmem:[%s7] sm:$0xf]
  %771 = vset.pattern.permute.xlu0 0
  %772 = vperm.xlu0 %771, %v769
  %v773 = vpop.permute.xlu0 %772
  %vm775 = vcmask 588800
  %v777 = vsel %vm775, %v732, 0
  %779 = vmatprep.subr.mxu0 0.0
  %780 = vmatpush1.msra.mxu0 0.0
  %781 = vmatprep.subr.mxu0 0.0
  %782 = vmatpush1.msra.mxu0 0.0
  %783 = vmatprep.subr.mxu0 0.0
  %784 = vmatpush1.msra.mxu0 0.0
  %785 = vmatprep.subr.mxu0 0.0
  %786 = vmatpush1.msra.mxu0 0.0
  %787 = vmatprep.subr.mxu0 0.0
  %788 = vmatpush1.msra.mxu0 0.0
  %789 = vmatprep.subr.mxu0 0.0
  %790 = vmatpush1.msra.mxu0 0.0
  %791 = vmatprep.subr.mxu0 0.0
  %792 = vmatpush1.msra.mxu0 0.0
  %793 = vmatprep.subr.mxu0 %v766
  %794 = vmatpush1.msra.mxu0 %v765
  %795 = vmatprep.subr.mxu0 %v762
  %796 = vmatpush1.msra.mxu0 %v761
  %797 = vmatprep.subr.mxu0 %v758
  %798 = vmatpush1.msra.mxu0 %v757
  %799 = vmatprep.subr.mxu0 %v754
  %800 = vmatpush1.msra.mxu0 %v753
  %801 = vmatprep.subr.mxu0 %v750
  %802 = vmatpush1.msra.mxu0 %v749
  %803 = vmatprep.subr.mxu0 %v746
  %804 = vmatpush1.msra.mxu0 %v745
  %805 = vmatprep.subr.mxu0 %v742
  %806 = vmatpush1.msra.mxu0 %v741
  %807 = vmatprep.subr.mxu0 %v738
  %808 = vmatpush1.msra.mxu0 %v737
  %809 = vmatprep.subr.mxu0 %v734
  %810 = vmatpush1.msra.mxu0 %v733
  %811 = vmatprep.subr.mxu0 0.0
  %812 = vmatpush2.msra.mxu0 0.0
  %813 = vmatprep.subr.mxu0 0.0
  %814 = vmatpush2.msra.mxu0 0.0
  %815 = vmatprep.subr.mxu0 0.0
  %816 = vmatpush2.msra.mxu0 0.0
  %817 = vmatprep.subr.mxu0 0.0
  %818 = vmatpush2.msra.mxu0 0.0
  %819 = vmatprep.subr.mxu0 0.0
  %820 = vmatpush2.msra.mxu0 0.0
  %821 = vmatprep.subr.mxu0 0.0
  %822 = vmatpush2.msra.mxu0 0.0
  %823 = vmatprep.subr.mxu0 0.0
  %824 = vmatpush2.msra.mxu0 0.0
  %825 = vmatprep.subr.mxu0 0.0
  %826 = vmatpush2.msra.mxu0 0.0
  %827 = vmatprep.subr.mxu0 0.0
  %828 = vmatpush2.msra.mxu0 0.0
  %829 = vmatprep.subr.mxu0 0.0
  %830 = vmatpush2.msra.mxu0 0.0
  %831 = vmatprep.subr.mxu0 0.0
  %832 = vmatpush2.msra.mxu0 0.0
  %833 = vmatprep.subr.mxu0 0.0
  %834 = vmatpush2.msra.mxu0 0.0
  %835 = vmatprep.subr.mxu0 0.0
  %836 = vmatpush2.msra.mxu0 0.0
  %837 = vmatprep.subr.mxu0 0.0
  %838 = vmatpush2.msra.mxu0 0.0
  %839 = vmatprep.subr.mxu0 0.0
  %840 = vmatpush2.msra.mxu0 0.0
  %841 = vmatprep.subr.mxu0 0.0
  %842 = vmatpush2.msra.mxu0 0.0
  %843 = vmatprep.mubr.f32.mxu0 0.0
  %844 = vmatmul.mubr.f32.gmra.mxu0 %v777
  %v845 = vpop.f32.mrf.mxu0
  %v846 = vadd.f32 %v773, %v845
  %v847 = vpop.f32.mrf.mxu0
  %v848 = vadd.f32 %v773, %v847
  %849 = vdwg.mxu0
  %850 = vmatprep.subr.mxu0 0.0
  %851 = vmatpush1.msra.mxu0 0.0
  %852 = vmatprep.subr.mxu0 0.0
  %853 = vmatpush1.msra.mxu0 0.0
  %854 = vmatprep.subr.mxu0 0.0
  %855 = vmatpush1.msra.mxu0 0.0
  %856 = vmatprep.subr.mxu0 0.0
  %857 = vmatpush1.msra.mxu0 0.0
  %858 = vmatprep.subr.mxu0 0.0
  %859 = vmatpush1.msra.mxu0 0.0
  %860 = vmatprep.subr.mxu0 0.0
  %861 = vmatpush1.msra.mxu0 0.0
  %862 = vmatprep.subr.mxu0 0.0
  %863 = vmatpush1.msra.mxu0 0.0
  %864 = vmatprep.subr.mxu0 %v768
  %865 = vmatpush1.msra.mxu0 %v767
  %866 = vmatprep.subr.mxu0 %v764
  %867 = vmatpush1.msra.mxu0 %v763
  %868 = vmatprep.subr.mxu0 %v760
  %869 = vmatpush1.msra.mxu0 %v759
  %870 = vmatprep.subr.mxu0 %v756
  %871 = vmatpush1.msra.mxu0 %v755
  %872 = vmatprep.subr.mxu0 %v752
  %873 = vmatpush1.msra.mxu0 %v751
  %874 = vmatprep.subr.mxu0 %v748
  %875 = vmatpush1.msra.mxu0 %v747
  %876 = vmatprep.subr.mxu0 %v744
  %877 = vmatpush1.msra.mxu0 %v743
  %878 = vmatprep.subr.mxu0 %v740
  %879 = vmatpush1.msra.mxu0 %v739
  %880 = vmatprep.subr.mxu0 %v736
  %881 = vmatpush1.msra.mxu0 %v735
  %882 = vmatprep.subr.mxu0 0.0
  %883 = vmatpush2.msra.mxu0 0.0
  %884 = vmatprep.subr.mxu0 0.0
  %885 = vmatpush2.msra.mxu0 0.0
  %886 = vmatprep.subr.mxu0 0.0
  %887 = vmatpush2.msra.mxu0 0.0
  %888 = vmatprep.subr.mxu0 0.0
  %889 = vmatpush2.msra.mxu0 0.0
  %890 = vmatprep.subr.mxu0 0.0
  %891 = vmatpush2.msra.mxu0 0.0
  %892 = vmatprep.subr.mxu0 0.0
  %893 = vmatpush2.msra.mxu0 0.0
  %894 = vmatprep.subr.mxu0 0.0
  %895 = vmatpush2.msra.mxu0 0.0
  %896 = vmatprep.subr.mxu0 0.0
  %897 = vmatpush2.msra.mxu0 0.0
  %898 = vmatprep.subr.mxu0 0.0
  %899 = vmatpush2.msra.mxu0 0.0
  %900 = vmatprep.subr.mxu0 0.0
  %901 = vmatpush2.msra.mxu0 0.0
  %902 = vmatprep.subr.mxu0 0.0
  %903 = vmatpush2.msra.mxu0 0.0
  %904 = vmatprep.subr.mxu0 0.0
  %905 = vmatpush2.msra.mxu0 0.0
  %906 = vmatprep.subr.mxu0 0.0
  %907 = vmatpush2.msra.mxu0 0.0
  %908 = vmatprep.subr.mxu0 0.0
  %909 = vmatpush2.msra.mxu0 0.0
  %910 = vmatprep.subr.mxu0 0.0
  %911 = vmatpush2.msra.mxu0 0.0
  %912 = vmatprep.subr.mxu0 0.0
  %913 = vmatpush2.msra.mxu0 0.0
  %914 = vmatprep.mubr.f32.mxu0 0.0
  %915 = vmatmul.mubr.f32.gmra.mxu0 %v777
  %v916 = vpop.f32.mrf.mxu0
  %v917 = vadd.f32 %v773, %v916
  %v918 = vpop.f32.mrf.mxu0
  %v919 = vadd.f32 %v773, %v918
  %920 = vdwg.mxu0
  %vm921 = vcmask 1043456
  %v922 = vsel %vm921, %v846, 0.0
  %v923 = vsel %vm921, %v848, 0.0
  %v924 = vadd.f32 %v922, %v923
  %v925 = vsel %vm921, %v917, 0.0
  %v926 = vadd.f32 %v924, %v925
  %v927 = vsel %vm921, %v919, 0.0
  %v928 = vadd.f32 %v926, %v927
  %929 = vadd.xlane.f32.xlu0 %v928
  %v930 = vpop.xlane.xlu0 %929
  %v931 = vrcp.pop 512.0
  %v932 = vmul.f32 %v930, %v931
  %v933 = vsub.f32 %v846, %v932
  %v934 = vsub.f32 %v848, %v932
  %v935 = vsub.f32 %v917, %v932
  %v936 = vsub.f32 %v919, %v932
  %v937 = vmul.f32 %v933, %v933
  %v938 = vmul.f32 %v934, %v934
  %v939 = vmul.f32 %v935, %v935
  %v940 = vmul.f32 %v936, %v936
  %v941 = vsel %vm921, %v937, 0.0
  %v942 = vsel %vm921, %v938, 0.0
  %v943 = vadd.f32 %v941, %v942
  %v944 = vsel %vm921, %v939, 0.0
  %v945 = vadd.f32 %v943, %v944
  %v946 = vsel %vm921, %v940, 0.0
  %v947 = vadd.f32 %v945, %v946
  %948 = vadd.xlane.f32.xlu0 %v947
  %v949 = vpop.xlane.xlu0 %948
  %v950 = vmul.f32 %v949, %v931
  %v951 = vadd.f32 %v950, 1e-05
  %v952 = vrsqrt.pop %v951
  %v953 = vmul.f32 %v933, %v952
  %v954 = vmul.f32 %v934, %v952
  %v955 = vmul.f32 %v935, %v952
  %v956 = vmul.f32 %v936, %v952
  %v957 = vld [vmem:[%s8] sm:$0xf]
  %959 = vset.pattern.permute.xlu0 0
  %960 = vperm.xlu0 %959, %v957
  %v961 = vpop.permute.xlu0 %960
  %v963 = vmul.f32 %v953, %v961
  %v964 = vmul.f32 %v954, %v961
  %v965 = vmul.f32 %v955, %v961
  %v966 = vmul.f32 %v956, %v961
  %v967 = vld [vmem:[%s9] sm:$0xf]
  %969 = vset.pattern.permute.xlu0 0
  %970 = vperm.xlu0 %969, %v967
  %v971 = vpop.permute.xlu0 %970
  %v973 = vadd.f32 %v963, %v971
  %v974 = vadd.f32 %v964, %v971
  %v975 = vadd.f32 %v965, %v971
  %v976 = vadd.f32 %v966, %v971
  %v977 = vmax.f32 %v973, 0.0
  %v978 = vmax.f32 %v974, 0.0
  %v979 = vmax.f32 %v975, 0.0
  %v980 = vmax.f32 %v976, 0.0
  %981 = vrot.lane.b32.xlu0 %v977, 17
  %v982 = vpop.permute.xlu0 %981
  %983 = vrot.lane.b32.xlu0 %v978, 17
  %v984 = vpop.permute.xlu0 %983
  %985 = vrot.lane.b32.xlu0 %v979, 17
  %v986 = vpop.permute.xlu0 %985
  %987 = vrot.lane.b32.xlu0 %v980, 17
  %v988 = vpop.permute.xlu0 %987
  %v989 = vsel %vm385, %v986, %v988
  %v990 = vsel %vm385, %v984, %v986
  %v991 = vsel %vm385, %v982, %v984
  %v992 = vsel %vm385, %v988, %v982
  %v993 = vld [vmem:[%s3] ss:$8 sm:$0xf]
  %v995 = vlaneseq
  %v996 = vshrl.u32 %v995, 7
  %v997 = vsub.s32 0, %v996
  %v998 = vrot.slane %v993, %v997
  %v999 = vlaneseq
  %v1000 = vshrl.u32 %v999, 7
  %v1001 = vsub.s32 1, %v1000
  %v1002 = vrot.slane %v993, %v1001
  %v1003 = vlaneseq
  %v1004 = vshrl.u32 %v1003, 7
  %v1005 = vsub.s32 2, %v1004
  %v1006 = vrot.slane %v993, %v1005
  %v1007 = vlaneseq
  %v1008 = vshrl.u32 %v1007, 7
  %v1009 = vsub.s32 3, %v1008
  %v1010 = vrot.slane %v993, %v1009
  %v1015 = vmul.f32 %v992, %v998
  %v1016 = vmul.f32 %v991, %v1002
  %v1017 = vmul.f32 %v990, %v1006
  %v1018 = vmul.f32 %v989, %v1010
  %1019 = vst [vmem:[#allocation5] sm:$0xf] %v1015
  %1020 = vst [vmem:[#allocation5 + $0x8] sm:$0xf] %v1016
  %1021 = vst [vmem:[#allocation5 + $0x10] sm:$0xf] %v1017
  %1022 = vst [vmem:[#allocation5 + $0x18] sm:$0xf] %v1018
  %1023 = vrot.lane.b32.xlu0 %v977, 16
  %v1024 = vpop.permute.xlu0 %1023
  %1025 = vrot.lane.b32.xlu0 %v978, 16
  %v1026 = vpop.permute.xlu0 %1025
  %1027 = vrot.lane.b32.xlu0 %v979, 16
  %v1028 = vpop.permute.xlu0 %1027
  %1029 = vrot.lane.b32.xlu0 %v980, 16
  %v1030 = vpop.permute.xlu0 %1029
  %v1031 = vsel %vm428, %v1028, %v1030
  %v1032 = vsel %vm428, %v1026, %v1028
  %v1033 = vsel %vm428, %v1024, %v1026
  %v1034 = vsel %vm428, %v1030, %v1024
  %v1035 = vld [vmem:[%s433] ss:$8 sm:$0xf]
  %v1037 = vlaneseq
  %v1038 = vshrl.u32 %v1037, 7
  %v1039 = vsub.s32 0, %v1038
  %v1040 = vrot.slane %v1035, %v1039
  %v1041 = vlaneseq
  %v1042 = vshrl.u32 %v1041, 7
  %v1043 = vsub.s32 1, %v1042
  %v1044 = vrot.slane %v1035, %v1043
  %v1045 = vlaneseq
  %v1046 = vshrl.u32 %v1045, 7
  %v1047 = vsub.s32 2, %v1046
  %v1048 = vrot.slane %v1035, %v1047
  %v1049 = vlaneseq
  %v1050 = vshrl.u32 %v1049, 7
  %v1051 = vsub.s32 3, %v1050
  %v1052 = vrot.slane %v1035, %v1051
  %v1057 = vmul.f32 %v1034, %v1040
  %v1058 = vmul.f32 %v1033, %v1044
  %v1059 = vmul.f32 %v1032, %v1048
  %v1060 = vmul.f32 %v1031, %v1052
  %v1065 = vrot.slane %v1057, 4
  %v1066 = vrot.slane %v1058, 4
  %v1067 = vrot.slane %v1059, 4
  %v1068 = vrot.slane %v1060, 4
  %1073 = vst [vmem:[#allocation5] sm:$0xf0] %v1065
  %1074 = vst [vmem:[#allocation5 + $0x8] sm:$0xf0] %v1066
  %1075 = vst [vmem:[#allocation5 + $0x10] sm:$0xf0] %v1067
  %1076 = vst [vmem:[#allocation5 + $0x18] sm:$0xf0] %v1068
  %1077 = vrot.lane.b32.xlu0 %v977, 15
  %v1078 = vpop.permute.xlu0 %1077
  %1079 = vrot.lane.b32.xlu0 %v978, 15
  %v1080 = vpop.permute.xlu0 %1079
  %1081 = vrot.lane.b32.xlu0 %v979, 15
  %v1082 = vpop.permute.xlu0 %1081
  %1083 = vrot.lane.b32.xlu0 %v980, 15
  %v1084 = vpop.permute.xlu0 %1083
  %v1085 = vsel %vm472, %v1082, %v1084
  %v1086 = vsel %vm472, %v1080, %v1082
  %v1087 = vsel %vm472, %v1078, %v1080
  %v1088 = vsel %vm472, %v1084, %v1078
  %v1089 = vld [vmem:[%s477] ss:$8 sm:$0xf]
  %v1091 = vlaneseq
  %v1092 = vshrl.u32 %v1091, 7
  %v1093 = vsub.s32 0, %v1092
  %v1094 = vrot.slane %v1089, %v1093
  %v1095 = vlaneseq
  %v1096 = vshrl.u32 %v1095, 7
  %v1097 = vsub.s32 1, %v1096
  %v1098 = vrot.slane %v1089, %v1097
  %v1099 = vlaneseq
  %v1100 = vshrl.u32 %v1099, 7
  %v1101 = vsub.s32 2, %v1100
  %v1102 = vrot.slane %v1089, %v1101
  %v1103 = vlaneseq
  %v1104 = vshrl.u32 %v1103, 7
  %v1105 = vsub.s32 3, %v1104
  %v1106 = vrot.slane %v1089, %v1105
  %v1111 = vmul.f32 %v1088, %v1094
  %v1112 = vmul.f32 %v1087, %v1098
  %v1113 = vmul.f32 %v1086, %v1102
  %v1114 = vmul.f32 %v1085, %v1106
  %1115 = vst [vmem:[#allocation5 + $0x20] sm:$0xf] %v1111
  %1116 = vst [vmem:[#allocation5 + $0x28] sm:$0xf] %v1112
  %1117 = vst [vmem:[#allocation5 + $0x30] sm:$0xf] %v1113
  %1118 = vst [vmem:[#allocation5 + $0x38] sm:$0xf] %v1114
  %1119 = vrot.lane.b32.xlu0 %v977, 1
  %v1120 = vpop.permute.xlu0 %1119
  %1121 = vrot.lane.b32.xlu0 %v978, 1
  %v1122 = vpop.permute.xlu0 %1121
  %1123 = vrot.lane.b32.xlu0 %v979, 1
  %v1124 = vpop.permute.xlu0 %1123
  %1125 = vrot.lane.b32.xlu0 %v980, 1
  %v1126 = vpop.permute.xlu0 %1125
  %v1127 = vsel %vm516, %v1124, %v1126
  %v1128 = vsel %vm516, %v1122, %v1124
  %v1129 = vsel %vm516, %v1120, %v1122
  %v1130 = vsel %vm516, %v1126, %v1120
  %v1131 = vld [vmem:[%s521] ss:$8 sm:$0xf]
  %v1133 = vlaneseq
  %v1134 = vshrl.u32 %v1133, 7
  %v1135 = vsub.s32 0, %v1134
  %v1136 = vrot.slane %v1131, %v1135
  %v1137 = vlaneseq
  %v1138 = vshrl.u32 %v1137, 7
  %v1139 = vsub.s32 1, %v1138
  %v1140 = vrot.slane %v1131, %v1139
  %v1141 = vlaneseq
  %v1142 = vshrl.u32 %v1141, 7
  %v1143 = vsub.s32 2, %v1142
  %v1144 = vrot.slane %v1131, %v1143
  %v1145 = vlaneseq
  %v1146 = vshrl.u32 %v1145, 7
  %v1147 = vsub.s32 3, %v1146
  %v1148 = vrot.slane %v1131, %v1147
  %v1153 = vmul.f32 %v1130, %v1136
  %v1154 = vmul.f32 %v1129, %v1140
  %v1155 = vmul.f32 %v1128, %v1144
  %v1156 = vmul.f32 %v1127, %v1148
  %v1161 = vrot.slane %v1153, 4
  %v1162 = vrot.slane %v1154, 4
  %v1163 = vrot.slane %v1155, 4
  %v1164 = vrot.slane %v1156, 4
  %1169 = vst [vmem:[#allocation5 + $0x20] sm:$0xf0] %v1161
  %1170 = vst [vmem:[#allocation5 + $0x28] sm:$0xf0] %v1162
  %1171 = vst [vmem:[#allocation5 + $0x30] sm:$0xf0] %v1163
  %1172 = vst [vmem:[#allocation5 + $0x38] sm:$0xf0] %v1164
  %1173 = vst [vmem:[#allocation5 + $0x40] sm:$0xf] %v977
  %1174 = vst [vmem:[#allocation5 + $0x48] sm:$0xf] %v978
  %1175 = vst [vmem:[#allocation5 + $0x50] sm:$0xf] %v979
  %1176 = vst [vmem:[#allocation5 + $0x58] sm:$0xf] %v980
  %1177 = vrot.lane.b32.xlu0 %v977, 127
  %v1178 = vpop.permute.xlu0 %1177
  %1179 = vrot.lane.b32.xlu0 %v978, 127
  %v1180 = vpop.permute.xlu0 %1179
  %1181 = vrot.lane.b32.xlu0 %v979, 127
  %v1182 = vpop.permute.xlu0 %1181
  %1183 = vrot.lane.b32.xlu0 %v980, 127
  %v1184 = vpop.permute.xlu0 %1183
  %v1185 = vsel %vm564, %v1182, %v1184
  %v1186 = vsel %vm564, %v1180, %v1182
  %v1187 = vsel %vm564, %v1178, %v1180
  %v1188 = vsel %vm564, %v1184, %v1178
  %v1189 = vld [vmem:[%s569] ss:$8 sm:$0xf]
  %v1191 = vlaneseq
  %v1192 = vshrl.u32 %v1191, 7
  %v1193 = vsub.s32 0, %v1192
  %v1194 = vrot.slane %v1189, %v1193
  %v1195 = vlaneseq
  %v1196 = vshrl.u32 %v1195, 7
  %v1197 = vsub.s32 1, %v1196
  %v1198 = vrot.slane %v1189, %v1197
  %v1199 = vlaneseq
  %v1200 = vshrl.u32 %v1199, 7
  %v1201 = vsub.s32 2, %v1200
  %v1202 = vrot.slane %v1189, %v1201
  %v1203 = vlaneseq
  %v1204 = vshrl.u32 %v1203, 7
  %v1205 = vsub.s32 3, %v1204
  %v1206 = vrot.slane %v1189, %v1205
  %v1211 = vmul.f32 %v1187, %v1194
  %v1212 = vmul.f32 %v1186, %v1198
  %v1213 = vmul.f32 %v1185, %v1202
  %v1214 = vmul.f32 %v1188, %v1206
  %v1219 = vrot.slane %v1211, 4
  %v1220 = vrot.slane %v1212, 4
  %v1221 = vrot.slane %v1213, 4
  %v1222 = vrot.slane %v1214, 4
  %1227 = vst [vmem:[#allocation5 + $0x40] sm:$0xf0] %v1219
  %1228 = vst [vmem:[#allocation5 + $0x48] sm:$0xf0] %v1220
  %1229 = vst [vmem:[#allocation5 + $0x50] sm:$0xf0] %v1221
  %1230 = vst [vmem:[#allocation5 + $0x58] sm:$0xf0] %v1222
  %1231 = vrot.lane.b32.xlu0 %v977, 113
  %v1232 = vpop.permute.xlu0 %1231
  %1233 = vrot.lane.b32.xlu0 %v978, 113
  %v1234 = vpop.permute.xlu0 %1233
  %1235 = vrot.lane.b32.xlu0 %v979, 113
  %v1236 = vpop.permute.xlu0 %1235
  %1237 = vrot.lane.b32.xlu0 %v980, 113
  %v1238 = vpop.permute.xlu0 %1237
  %v1239 = vsel %vm608, %v1236, %v1238
  %v1240 = vsel %vm608, %v1234, %v1236
  %v1241 = vsel %vm608, %v1232, %v1234
  %v1242 = vsel %vm608, %v1238, %v1232
  %v1243 = vld [vmem:[%s613] ss:$8 sm:$0xf]
  %v1245 = vlaneseq
  %v1246 = vshrl.u32 %v1245, 7
  %v1247 = vsub.s32 0, %v1246
  %v1248 = vrot.slane %v1243, %v1247
  %v1249 = vlaneseq
  %v1250 = vshrl.u32 %v1249, 7
  %v1251 = vsub.s32 1, %v1250
  %v1252 = vrot.slane %v1243, %v1251
  %v1253 = vlaneseq
  %v1254 = vshrl.u32 %v1253, 7
  %v1255 = vsub.s32 2, %v1254
  %v1256 = vrot.slane %v1243, %v1255
  %v1257 = vlaneseq
  %v1258 = vshrl.u32 %v1257, 7
  %v1259 = vsub.s32 3, %v1258
  %v1260 = vrot.slane %v1243, %v1259
  %v1265 = vmul.f32 %v1241, %v1248
  %v1266 = vmul.f32 %v1240, %v1252
  %v1267 = vmul.f32 %v1239, %v1256
  %v1268 = vmul.f32 %v1242, %v1260
  %1269 = vst [vmem:[#allocation5 + $0x60] sm:$0xf] %v1265
  %1270 = vst [vmem:[#allocation5 + $0x68] sm:$0xf] %v1266
  %1271 = vst [vmem:[#allocation5 + $0x70] sm:$0xf] %v1267
  %1272 = vst [vmem:[#allocation5 + $0x78] sm:$0xf] %v1268
  %1273 = vrot.lane.b32.xlu0 %v977, 112
  %v1274 = vpop.permute.xlu0 %1273
  %1275 = vrot.lane.b32.xlu0 %v978, 112
  %v1276 = vpop.permute.xlu0 %1275
  %1277 = vrot.lane.b32.xlu0 %v979, 112
  %v1278 = vpop.permute.xlu0 %1277
  %1279 = vrot.lane.b32.xlu0 %v980, 112
  %v1280 = vpop.permute.xlu0 %1279
  %v1281 = vsel %vm652, %v1278, %v1280
  %v1282 = vsel %vm652, %v1276, %v1278
  %v1283 = vsel %vm652, %v1274, %v1276
  %v1284 = vsel %vm652, %v1280, %v1274
  %v1285 = vld [vmem:[%s657] ss:$8 sm:$0xf]
  %v1287 = vlaneseq
  %v1288 = vshrl.u32 %v1287, 7
  %v1289 = vsub.s32 0, %v1288
  %v1290 = vrot.slane %v1285, %v1289
  %v1291 = vlaneseq
  %v1292 = vshrl.u32 %v1291, 7
  %v1293 = vsub.s32 1, %v1292
  %v1294 = vrot.slane %v1285, %v1293
  %v1295 = vlaneseq
  %v1296 = vshrl.u32 %v1295, 7
  %v1297 = vsub.s32 2, %v1296
  %v1298 = vrot.slane %v1285, %v1297
  %v1299 = vlaneseq
  %v1300 = vshrl.u32 %v1299, 7
  %v1301 = vsub.s32 3, %v1300
  %v1302 = vrot.slane %v1285, %v1301
  %v1307 = vmul.f32 %v1283, %v1290
  %v1308 = vmul.f32 %v1282, %v1294
  %v1309 = vmul.f32 %v1281, %v1298
  %v1310 = vmul.f32 %v1284, %v1302
  %v1315 = vrot.slane %v1307, 4
  %v1316 = vrot.slane %v1308, 4
  %v1317 = vrot.slane %v1309, 4
  %v1318 = vrot.slane %v1310, 4
  %1323 = vst [vmem:[#allocation5 + $0x60] sm:$0xf0] %v1315
  %1324 = vst [vmem:[#allocation5 + $0x68] sm:$0xf0] %v1316
  %1325 = vst [vmem:[#allocation5 + $0x70] sm:$0xf0] %v1317
  %1326 = vst [vmem:[#allocation5 + $0x78] sm:$0xf0] %v1318
  %1327 = vrot.lane.b32.xlu0 %v977, 111
  %v1328 = vpop.permute.xlu0 %1327
  %1329 = vrot.lane.b32.xlu0 %v978, 111
  %v1330 = vpop.permute.xlu0 %1329
  %1331 = vrot.lane.b32.xlu0 %v979, 111
  %v1332 = vpop.permute.xlu0 %1331
  %1333 = vrot.lane.b32.xlu0 %v980, 111
  %v1334 = vpop.permute.xlu0 %1333
  %v1335 = vsel %vm696, %v1332, %v1334
  %v1336 = vsel %vm696, %v1330, %v1332
  %v1337 = vsel %vm696, %v1328, %v1330
  %v1338 = vsel %vm696, %v1334, %v1328
  %v1339 = vld [vmem:[%s701] ss:$8 sm:$0xf]
  %v1341 = vlaneseq
  %v1342 = vshrl.u32 %v1341, 7
  %v1343 = vsub.s32 0, %v1342
  %v1344 = vrot.slane %v1339, %v1343
  %v1345 = vlaneseq
  %v1346 = vshrl.u32 %v1345, 7
  %v1347 = vsub.s32 1, %v1346
  %v1348 = vrot.slane %v1339, %v1347
  %v1349 = vlaneseq
  %v1350 = vshrl.u32 %v1349, 7
  %v1351 = vsub.s32 2, %v1350
  %v1352 = vrot.slane %v1339, %v1351
  %v1353 = vlaneseq
  %v1354 = vshrl.u32 %v1353, 7
  %v1355 = vsub.s32 3, %v1354
  %v1356 = vrot.slane %v1339, %v1355
  %v1361 = vmul.f32 %v1337, %v1344
  %v1362 = vmul.f32 %v1336, %v1348
  %v1363 = vmul.f32 %v1335, %v1352
  %v1364 = vmul.f32 %v1338, %v1356
  %1365 = vst [vmem:[#allocation5 + $0x80] sm:$0xf] %v1361
  %1366 = vst [vmem:[#allocation5 + $0x88] sm:$0xf] %v1362
  %1367 = vst [vmem:[#allocation5 + $0x90] sm:$0xf] %v1363
  %1368 = vst [vmem:[#allocation5 + $0x98] sm:$0xf] %v1364
  %v1369 = vld [vmem:[%s10] sm:$0xf]
  %v1370 = vld [vmem:[#allocation5] sm:$0xff]
  %v1371 = vld [vmem:[#allocation5 + $0x8] sm:$0xff]
  %v1372 = vld [vmem:[#allocation5 + $0x10] sm:$0xff]
  %v1373 = vld [vmem:[#allocation5 + $0x18] sm:$0xff]
  %v1374 = vld [vmem:[#allocation5 + $0x20] sm:$0xff]
  %v1375 = vld [vmem:[#allocation5 + $0x28] sm:$0xff]
  %v1376 = vld [vmem:[#allocation5 + $0x30] sm:$0xff]
  %v1377 = vld [vmem:[#allocation5 + $0x38] sm:$0xff]
  %v1378 = vld [vmem:[#allocation5 + $0x40] sm:$0xff]
  %v1379 = vld [vmem:[#allocation5 + $0x48] sm:$0xff]
  %v1380 = vld [vmem:[#allocation5 + $0x50] sm:$0xff]
  %v1381 = vld [vmem:[#allocation5 + $0x58] sm:$0xff]
  %v1382 = vld [vmem:[#allocation5 + $0x60] sm:$0xff]
  %v1383 = vld [vmem:[#allocation5 + $0x68] sm:$0xff]
  %v1384 = vld [vmem:[#allocation5 + $0x70] sm:$0xff]
  %v1385 = vld [vmem:[#allocation5 + $0x78] sm:$0xff]
  %v1386 = vld [vmem:[#allocation5 + $0x80] sm:$0xf]
  %v1387 = vld [vmem:[#allocation5 + $0x88] sm:$0xf]
  %v1388 = vld [vmem:[#allocation5 + $0x90] sm:$0xf]
  %v1389 = vld [vmem:[#allocation5 + $0x98] sm:$0xf]
  %v1390 = vld [vmem:[%s11] sm:$0xf]
  %1392 = vset.pattern.permute.xlu0 0
  %1393 = vperm.xlu0 %1392, %v1390
  %v1394 = vpop.permute.xlu0 %1393
  %vm1396 = vcmask 293888
  %v1398 = vsel %vm1396, %v1369, 0
  %v1401 = vsel %vm921, %v1386, 0
  %v1404 = vsel %vm921, %v1387, 0
  %v1407 = vsel %vm921, %v1388, 0
  %v1410 = vsel %vm921, %v1389, 0
  %1412 = vmatprep.subr.mxu0 0.0
  %1413 = vmatpush1.msra.mxu0 0.0
  %1414 = vmatprep.subr.mxu0 0.0
  %1415 = vmatpush1.msra.mxu0 0.0
  %1416 = vmatprep.subr.mxu0 0.0
  %1417 = vmatpush1.msra.mxu0 0.0
  %1418 = vmatprep.subr.mxu0 0.0
  %1419 = vmatpush1.msra.mxu0 0.0
  %1420 = vmatprep.subr.mxu0 0.0
  %1421 = vmatpush1.msra.mxu0 0.0
  %1422 = vmatprep.subr.mxu0 0.0
  %1423 = vmatpush1.msra.mxu0 0.0
  %1424 = vmatprep.subr.mxu0 0.0
  %1425 = vmatpush1.msra.mxu0 0.0
  %1426 = vmatprep.subr.mxu0 0.0
  %1427 = vmatpush1.msra.mxu0 0.0
  %1428 = vmatprep.subr.mxu0 0.0
  %1429 = vmatpush1.msra.mxu0 0.0
  %1430 = vmatprep.subr.mxu0 0.0
  %1431 = vmatpush1.msra.mxu0 0.0
  %1432 = vmatprep.subr.mxu0 0.0
  %1433 = vmatpush1.msra.mxu0 0.0
  %1434 = vmatprep.subr.mxu0 %v1404
  %1435 = vmatpush1.msra.mxu0 %v1401
  %1436 = vmatprep.subr.mxu0 %v1383
  %1437 = vmatpush1.msra.mxu0 %v1382
  %1438 = vmatprep.subr.mxu0 %v1379
  %1439 = vmatpush1.msra.mxu0 %v1378
  %1440 = vmatprep.subr.mxu0 %v1375
  %1441 = vmatpush1.msra.mxu0 %v1374
  %1442 = vmatprep.subr.mxu0 %v1371
  %1443 = vmatpush1.msra.mxu0 %v1370
  %1444 = vmatprep.subr.mxu0 0.0
  %1445 = vmatpush2.msra.mxu0 0.0
  %1446 = vmatprep.subr.mxu0 0.0
  %1447 = vmatpush2.msra.mxu0 0.0
  %1448 = vmatprep.subr.mxu0 0.0
  %1449 = vmatpush2.msra.mxu0 0.0
  %1450 = vmatprep.subr.mxu0 0.0
  %1451 = vmatpush2.msra.mxu0 0.0
  %1452 = vmatprep.subr.mxu0 0.0
  %1453 = vmatpush2.msra.mxu0 0.0
  %1454 = vmatprep.subr.mxu0 0.0
  %1455 = vmatpush2.msra.mxu0 0.0
  %1456 = vmatprep.subr.mxu0 0.0
  %1457 = vmatpush2.msra.mxu0 0.0
  %1458 = vmatprep.subr.mxu0 0.0
  %1459 = vmatpush2.msra.mxu0 0.0
  %1460 = vmatprep.subr.mxu0 0.0
  %1461 = vmatpush2.msra.mxu0 0.0
  %1462 = vmatprep.subr.mxu0 0.0
  %1463 = vmatpush2.msra.mxu0 0.0
  %1464 = vmatprep.subr.mxu0 0.0
  %1465 = vmatpush2.msra.mxu0 0.0
  %1466 = vmatprep.subr.mxu0 0.0
  %1467 = vmatpush2.msra.mxu0 0.0
  %1468 = vmatprep.subr.mxu0 0.0
  %1469 = vmatpush2.msra.mxu0 0.0
  %1470 = vmatprep.subr.mxu0 0.0
  %1471 = vmatpush2.msra.mxu0 0.0
  %1472 = vmatprep.subr.mxu0 0.0
  %1473 = vmatpush2.msra.mxu0 0.0
  %1474 = vmatprep.subr.mxu0 0.0
  %1475 = vmatpush2.msra.mxu0 0.0
  %1476 = vmatprep.mubr.f32.mxu0 0.0
  %1477 = vmatmul.mubr.f32.gmra.mxu0 %v1398
  %v1478 = vpop.f32.mrf.mxu0
  %v1479 = vadd.f32 %v1394, %v1478
  %v1480 = vpop.f32.mrf.mxu0
  %v1481 = vadd.f32 %v1394, %v1480
  %1482 = vdwg.mxu0
  %1483 = vmatprep.subr.mxu0 0.0
  %1484 = vmatpush1.msra.mxu0 0.0
  %1485 = vmatprep.subr.mxu0 0.0
  %1486 = vmatpush1.msra.mxu0 0.0
  %1487 = vmatprep.subr.mxu0 0.0
  %1488 = vmatpush1.msra.mxu0 0.0
  %1489 = vmatprep.subr.mxu0 0.0
  %1490 = vmatpush1.msra.mxu0 0.0
  %1491 = vmatprep.subr.mxu0 0.0
  %1492 = vmatpush1.msra.mxu0 0.0
  %1493 = vmatprep.subr.mxu0 0.0
  %1494 = vmatpush1.msra.mxu0 0.0
  %1495 = vmatprep.subr.mxu0 0.0
  %1496 = vmatpush1.msra.mxu0 0.0
  %1497 = vmatprep.subr.mxu0 0.0
  %1498 = vmatpush1.msra.mxu0 0.0
  %1499 = vmatprep.subr.mxu0 0.0
  %1500 = vmatpush1.msra.mxu0 0.0
  %1501 = vmatprep.subr.mxu0 0.0
  %1502 = vmatpush1.msra.mxu0 0.0
  %1503 = vmatprep.subr.mxu0 0.0
  %1504 = vmatpush1.msra.mxu0 0.0
  %1505 = vmatprep.subr.mxu0 %v1410
  %1506 = vmatpush1.msra.mxu0 %v1407
  %1507 = vmatprep.subr.mxu0 %v1385
  %1508 = vmatpush1.msra.mxu0 %v1384
  %1509 = vmatprep.subr.mxu0 %v1381
  %1510 = vmatpush1.msra.mxu0 %v1380
  %1511 = vmatprep.subr.mxu0 %v1377
  %1512 = vmatpush1.msra.mxu0 %v1376
  %1513 = vmatprep.subr.mxu0 %v1373
  %1514 = vmatpush1.msra.mxu0 %v1372
  %1515 = vmatprep.subr.mxu0 0.0
  %1516 = vmatpush2.msra.mxu0 0.0
  %1517 = vmatprep.subr.mxu0 0.0
  %1518 = vmatpush2.msra.mxu0 0.0
  %1519 = vmatprep.subr.mxu0 0.0
  %1520 = vmatpush2.msra.mxu0 0.0
  %1521 = vmatprep.subr.mxu0 0.0
  %1522 = vmatpush2.msra.mxu0 0.0
  %1523 = vmatprep.subr.mxu0 0.0
  %1524 = vmatpush2.msra.mxu0 0.0
  %1525 = vmatprep.subr.mxu0 0.0
  %1526 = vmatpush2.msra.mxu0 0.0
  %1527 = vmatprep.subr.mxu0 0.0
  %1528 = vmatpush2.msra.mxu0 0.0
  %1529 = vmatprep.subr.mxu0 0.0
  %1530 = vmatpush2.msra.mxu0 0.0
  %1531 = vmatprep.subr.mxu0 0.0
  %1532 = vmatpush2.msra.mxu0 0.0
  %1533 = vmatprep.subr.mxu0 0.0
  %1534 = vmatpush2.msra.mxu0 0.0
  %1535 = vmatprep.subr.mxu0 0.0
  %1536 = vmatpush2.msra.mxu0 0.0
  %1537 = vmatprep.subr.mxu0 0.0
  %1538 = vmatpush2.msra.mxu0 0.0
  %1539 = vmatprep.subr.mxu0 0.0
  %1540 = vmatpush2.msra.mxu0 0.0
  %1541 = vmatprep.subr.mxu0 0.0
  %1542 = vmatpush2.msra.mxu0 0.0
  %1543 = vmatprep.subr.mxu0 0.0
  %1544 = vmatpush2.msra.mxu0 0.0
  %1545 = vmatprep.subr.mxu0 0.0
  %1546 = vmatpush2.msra.mxu0 0.0
  %1547 = vmatprep.mubr.f32.mxu0 0.0
  %1548 = vmatmul.mubr.f32.gmra.mxu0 %v1398
  %v1549 = vpop.f32.mrf.mxu0
  %v1550 = vadd.f32 %v1394, %v1549
  %v1551 = vpop.f32.mrf.mxu0
  %v1552 = vadd.f32 %v1394, %v1551
  %1553 = vdwg.mxu0
  %v1554 = vsel %vm921, %v1479, 0.0
  %v1555 = vsel %vm921, %v1481, 0.0
  %v1556 = vadd.f32 %v1554, %v1555
  %v1557 = vsel %vm921, %v1550, 0.0
  %v1558 = vadd.f32 %v1556, %v1557
  %v1559 = vsel %vm921, %v1552, 0.0
  %v1560 = vadd.f32 %v1558, %v1559
  %1561 = vadd.xlane.f32.xlu0 %v1560
  %v1562 = vpop.xlane.xlu0 %1561
  %v1563 = vmul.f32 %v1562, %v931
  %v1564 = vsub.f32 %v1479, %v1563
  %v1565 = vsub.f32 %v1481, %v1563
  %v1566 = vsub.f32 %v1550, %v1563
  %v1567 = vsub.f32 %v1552, %v1563
  %v1568 = vmul.f32 %v1564, %v1564
  %v1569 = vmul.f32 %v1565, %v1565
  %v1570 = vmul.f32 %v1566, %v1566
  %v1571 = vmul.f32 %v1567, %v1567
  %v1572 = vsel %vm921, %v1568, 0.0
  %v1573 = vsel %vm921, %v1569, 0.0
  %v1574 = vadd.f32 %v1572, %v1573
  %v1575 = vsel %vm921, %v1570, 0.0
  %v1576 = vadd.f32 %v1574, %v1575
  %v1577 = vsel %vm921, %v1571, 0.0
  %v1578 = vadd.f32 %v1576, %v1577
  %1579 = vadd.xlane.f32.xlu0 %v1578
  %v1580 = vpop.xlane.xlu0 %1579
  %v1581 = vmul.f32 %v1580, %v931
  %v1582 = vadd.f32 %v1581, 1e-05
  %v1583 = vrsqrt.pop %v1582
  %v1584 = vmul.f32 %v1564, %v1583
  %v1585 = vmul.f32 %v1565, %v1583
  %v1586 = vmul.f32 %v1566, %v1583
  %v1587 = vmul.f32 %v1567, %v1583
  %v1588 = vld [vmem:[%s12] sm:$0xf]
  %1590 = vset.pattern.permute.xlu0 0
  %1591 = vperm.xlu0 %1590, %v1588
  %v1592 = vpop.permute.xlu0 %1591
  %v1594 = vmul.f32 %v1584, %v1592
  %v1595 = vmul.f32 %v1585, %v1592
  %v1596 = vmul.f32 %v1586, %v1592
  %v1597 = vmul.f32 %v1587, %v1592
  %v1598 = vld [vmem:[%s13] sm:$0xf]
  %1600 = vset.pattern.permute.xlu0 0
  %1601 = vperm.xlu0 %1600, %v1598
  %v1602 = vpop.permute.xlu0 %1601
  %v1604 = vadd.f32 %v1594, %v1602
  %v1605 = vadd.f32 %v1595, %v1602
  %v1606 = vadd.f32 %v1596, %v1602
  %v1607 = vadd.f32 %v1597, %v1602
  %v1608 = vmax.f32 %v1604, 0.0
  %v1609 = vmax.f32 %v1605, 0.0
  %v1610 = vmax.f32 %v1606, 0.0
  %v1611 = vmax.f32 %v1607, 0.0
  %v1616 = vcombine.low %v1608, %v1609
  %v1617 = vcombine.low %v1610, %v1611
  %1620 = vst [vmem:[%s14] sm:$0xff] %v1616
  %1621 = vst [vmem:[%s14 + $0x8] sm:$0xff] %v1617
  // Predicated region
  $region58: #{decoder_block_forward.1} parent=0 // pred_check
    _
  $region59: #{decoder_block_forward.1} parent=0 // pred_check_branch
    %1623 = sbr.rel (0) target = $region61
  $region60: #{decoder_block_forward.1} parent=0 // pred_region
    _
  $region61: #{decoder_block_forward.1} parent=0 // pred_fallthru
    _
  // Predicated region
  $region62: #{decoder_block_forward.1} parent=0 // pred_check
    _
  $region63: #{decoder_block_forward.1} parent=0 // pred_check_branch
    %1625 = sbr.rel (0) target = $region65
  $region64: #{decoder_block_forward.1} parent=0 // pred_region
    _
  $region65: #{decoder_block_forward.1} parent=0 // pred_fallthru
    _

</llo_original>
